<compile_context>
chip_gen: v7x
topology: tpu7x:2x2x1
jax: 0.10.0
libtpu: 0.0.40
codegen_flags: <defaults>
</compile_context>

<pallas_src>
import functools

import jax
import jax.numpy as jnp
import numpy as np
from jax.experimental import pallas as pl
from jax.experimental.pallas import tpu as pltpu


# --------------------------------------------------------------------------- #
# Kernel 1: one-shot Tucker-core preparation (loop-invariant over the batch).
#   K[f, g, c, d] = sum_{h,i} core[f, g, h, i] * fc[c, h] * fd[d, i]
# Chained 2-D MXU matmuls per (f, g); the Tucker ranks are tiny so the static
# unroll is cheap, and this runs exactly once (not per grid iteration).
# --------------------------------------------------------------------------- #
def _tucker_core_prep_kernel(core_ref, fc_ref, fdt_ref, k_ref):
    core = core_ref[...]          # (F, G, H, I)
    fc = fc_ref[...]              # (C, H)
    fdt = fdt_ref[...]            # (I, D)   (fd pre-transposed in the wrapper)
    F, G = core.shape[:2]
    for f in range(F):            # static unroll over the (small) Tucker ranks
        for g in range(G):
            ci = jnp.dot(fc, core[f, g], preferred_element_type=jnp.float32)           # (C, I)
            k_ref[f, g, :, :] = jnp.dot(ci, fdt, preferred_element_type=jnp.float32)   # (C, D)


# --------------------------------------------------------------------------- #
# Kernel 2: batched hot path. grid=(A,), one batch element per grid step.
#   y[f, cd]   = sum_b fb[b, f] * x[a, b, cd]      (MXU,  in-channels B -> rank F)
#   z[g, cd]   = sum_f K[f, g, cd] * y[f, cd]      (VPU FMA, unrolled over rank F)
#   out[e, cd] = sum_g fe[e, g] * z[g, cd]         (MXU,  rank G -> out-channels E)
# CD = modes_h * modes_w sits on the lane axis -> unmasked, lane-dense stores.
# --------------------------------------------------------------------------- #
def _contract_tucker_kernel(x_ref, fbt_ref, k_ref, fe_ref, o_ref, *, mxu_dtype):
    x = x_ref[0].astype(mxu_dtype)          # (B, CD)
    fbt = fbt_ref[...].astype(mxu_dtype)    # (F, B)

    # (1) in-channel projection on the MXU, f32 accumulation.
    y = jnp.dot(fbt, x, preferred_element_type=jnp.float32)         # (F, CD) f32

    # (2) per-mode rank mixing: tiny contracted dim -> unrolled lane-parallel FMA.
    #     Kept in f32 (VPU work; v5e has no bf16 VALU). Never materializes (F,G,CD)*y.
    F = k_ref.shape[0]
    z = k_ref[0] * y[0:1, :]                                         # (G, CD)
    for f in range(1, F):
        z = z + k_ref[f] * y[f:f + 1, :]

    # (3) rank -> out-channel expansion on the MXU, f32 accumulation.
    fe = fe_ref[...].astype(mxu_dtype)                               # (E, G)
    out = jnp.dot(fe, z.astype(mxu_dtype), preferred_element_type=jnp.float32)  # (E, CD)

    o_ref[0] = out.astype(o_ref.dtype)


# ------------------------------- Pallas wrapper ------------------------------ #
def contract_tucker_pallas(x, core, factors, *, mxu_dtype=jnp.float32):
    """x: (A, B, C, D); core: (F, G, H, I); factors: [(B,F), (E,G), (C,H), (D,I)]."""
    fb, fe, fc, fd = factors
    A, B, C, D = x.shape
    F = fb.shape[1]
    E, G = fe.shape
    CD = C * D

    # One-shot prep: pre-contract the core with the two mode factors.
    vmem = pl.BlockSpec(memory_space=pltpu.MemorySpace.VMEM)
    k4 = pl.pallas_call(
        _tucker_core_prep_kernel,
        out_shape=jax.ShapeDtypeStruct((F, G, C, D), jnp.float32),
        in_specs=[vmem, vmem, vmem],
        out_specs=vmem,
    )(core, fc, fd.T)

    # Layout plumbing outside the hot kernel: lane-dense CD axis, pre-transposed fb.
    k = k4.reshape(F, G, CD)
    x2 = x.reshape(A, B, CD)
    fbt = fb.T

    # TODO(synk): at production channel/mode counts also tile the out-channel axis E and
    # size blocks for v7x's 64 MiB VMEM (raise vmem_limit_bytes via pltpu.CompilerParams).
    out2 = pl.pallas_call(
        functools.partial(_contract_tucker_kernel, mxu_dtype=mxu_dtype),
        out_shape=jax.ShapeDtypeStruct((A, E, CD), jnp.float32),
        grid_spec=pltpu.PrefetchScalarGridSpec(
            num_scalar_prefetch=0,
            grid=(A,),
            in_specs=[
                pl.BlockSpec((1, B, CD), lambda a: (a, 0, 0)),    # per-batch x tile
                pl.BlockSpec((F, B), lambda a: (0, 0)),           # fb^T (resident)
                pl.BlockSpec((F, G, CD), lambda a: (0, 0, 0)),    # prepped core (resident)
                pl.BlockSpec((E, G), lambda a: (0, 0)),           # fe (resident)
            ],
            out_specs=pl.BlockSpec((1, E, CD), lambda a: (a, 0, 0)),
        ),
        compiler_params=pltpu.CompilerParams(
            dimension_semantics=("parallel",)),   # batch steps independent -> v7x 2-TC shard
    )(x2, fbt, k, fe)
    return out2.reshape(A, E, C, D)


# ------------------------------ module wrapper ------------------------------- #
def contract_tucker_forward(x, core, factors, dense_w=None, dense_b=None,
                            temb=None, act=jax.nn.silu, mxu_dtype=jnp.float32):
    """Mirrors contract_tucker.forward (non-separable, order-4 input)."""
    if temb is not None:
        # Dense_0(act(temb))[:, None]  -- PyTorch nn.Linear: y = t @ W^T + b
        h_t = act(temb) @ dense_w.T + dense_b     # (Bt, hidden)
        x = x + h_t[:, None]                       # same trailing-dim broadcast as torch
    return contract_tucker_pallas(x, core, factors, mxu_dtype=mxu_dtype)


def contract_tucker_reference(x, core, factors, dense_w=None, dense_b=None,
                              temb=None, act=jax.nn.silu):
    if temb is not None:
        h_t = act(temb) @ dense_w.T + dense_b
        x = x + h_t[:, None]
    fb, fe, fc, fd = factors
    return jnp.einsum('abcd,fghi,bf,eg,ch,di->aecd', x, core, fb, fe, fc, fd)


# ------------------------------ parameter init ------------------------------- #
def default_init_uniform(key, shape, scale=1.0):
    """variance_scaling(scale, 'fan_avg', 'uniform') like the PyTorch default_init."""
    fan_in, fan_out = shape[1], shape[0]
    variance = scale / ((fan_in + fan_out) / 2.0)
    lim = np.sqrt(3.0 * variance)
    return jax.random.uniform(key, shape, jnp.float32, minval=-lim, maxval=lim)


if __name__ == "__main__":
    key = jax.random.PRNGKey(0)
    k_x, k_core, k_f0, k_f1, k_f2, k_f3, k_t, k_w = jax.random.split(key, 8)

    # Small shapes: batch=4, in_ch=4, out_ch=8, modes 16x16, hidden=16,
    # Tucker ranks (2, 4, 8, 8).  batch==in_ch and hidden==modes_w so the PyTorch-style
    # temb broadcast `x += Dense(act(temb))[:, None]` is shape-compatible.
    A, B, E, C, D = 4, 4, 8, 16, 16
    hidden = 16
    Rb, Re, Rc, Rd = 2, 4, 8, 8

    x = jax.random.normal(k_x, (A, B, C, D), jnp.float32)
    core = jax.random.normal(k_core, (Rb, Re, Rc, Rd), jnp.float32) * 0.1
    factors = [
        jax.random.normal(k_f0, (B, Rb), jnp.float32) * 0.3,   # in-channel factor
        jax.random.normal(k_f1, (E, Re), jnp.float32) * 0.3,   # out-channel factor
        jax.random.normal(k_f2, (C, Rc), jnp.float32) * 0.3,   # mode-H factor
        jax.random.normal(k_f3, (D, Rd), jnp.float32) * 0.3,   # mode-W factor
    ]

    temb = jax.random.normal(k_t, (A, hidden), jnp.float32)
    dense_w = default_init_uniform(k_w, (hidden, hidden))       # nn.Linear weight (out, in)
    dense_b = jnp.zeros((hidden,), jnp.float32)                 # nn.init.zeros_

    ref = jax.block_until_ready(
        contract_tucker_reference(x, core, factors, dense_w, dense_b, temb))

    # f32 MXU operands (tight tolerance vs. the einsum reference).
    out_f32 = jax.block_until_ready(
        contract_tucker_forward(x, core, factors, dense_w, dense_b, temb,
                                mxu_dtype=jnp.float32))
    np.testing.assert_allclose(np.asarray(out_f32), np.asarray(ref), rtol=1e-4, atol=1e-4)

    # bf16 MXU operands with f32 accumulation (production setting on v6e/v7x).
    out_bf16 = jax.block_until_ready(
        contract_tucker_forward(x, core, factors, dense_w, dense_b, temb,
                                mxu_dtype=jnp.bfloat16))
    np.testing.assert_allclose(np.asarray(out_bf16), np.asarray(ref), rtol=5e-2, atol=5e-3)

    print("KERNEL_OK")
</pallas_src>

<mosaic_0001>
module attributes {stable_mosaic.version = 11 : i64} {
  func.func @_tucker_core_prep_kernel(%arg0: memref<2x4x8x8xf32, #tpu.memory_space<vmem>>, %arg1: memref<16x8xf32, #tpu.memory_space<vmem>>, %arg2: memref<8x16xf32, #tpu.memory_space<vmem>>, %arg3: memref<2x4x16x16xf32, #tpu.memory_space<vmem>>) attributes {dimension_semantics = [], scalar_prefetch = 0 : i64, scratch_operands = 0 : i64, tpu.core_type = #tpu.core_type<tc>} {
    %c0 = arith.constant 0 : index
    %c0_0 = arith.constant 0 : index
    %c0_1 = arith.constant 0 : index
    %c0_2 = arith.constant 0 : index
    %0 = vector.load %arg0[%c0, %c0_0, %c0_1, %c0_2] : memref<2x4x8x8xf32, #tpu.memory_space<vmem>>, vector<2x4x8x8xf32>
    %c0_3 = arith.constant 0 : index
    %c0_4 = arith.constant 0 : index
    %1 = vector.load %arg1[%c0_3, %c0_4] : memref<16x8xf32, #tpu.memory_space<vmem>>, vector<16x8xf32>
    %c0_5 = arith.constant 0 : index
    %c0_6 = arith.constant 0 : index
    %2 = vector.load %arg2[%c0_5, %c0_6] : memref<8x16xf32, #tpu.memory_space<vmem>>, vector<8x16xf32>
    %3 = vector.extract_strided_slice %0 {offsets = [0, 0, 0, 0], sizes = [1, 1, 8, 8], strides = [1, 1, 1, 1]} : vector<2x4x8x8xf32> to vector<1x1x8x8xf32>
    %4 = vector.shape_cast %3 : vector<1x1x8x8xf32> to vector<8x8xf32>
    %cst = arith.constant dense<0.000000e+00> : vector<16x8xf32>
    %5 = tpu.matmul %1, %4, %cst {dimension_numbers = #tpu.dot_dimension_numbers<[1], [0], [0], [1], [0, 0, 1, 1], [], []>} : vector<16x8xf32>, vector<8x8xf32>, vector<16x8xf32> -> vector<16x8xf32>
    %cst_7 = arith.constant dense<0.000000e+00> : vector<16x16xf32>
    %6 = tpu.matmul %5, %2, %cst_7 {dimension_numbers = #tpu.dot_dimension_numbers<[1], [0], [0], [1], [0, 0, 1, 1], [], []>} : vector<16x8xf32>, vector<8x16xf32>, vector<16x16xf32> -> vector<16x16xf32>
    %c0_8 = arith.constant 0 : index
    %c0_9 = arith.constant 0 : index
    %c0_10 = arith.constant 0 : index
    %c0_11 = arith.constant 0 : index
    %7 = vector.load %arg3[%c0_8, %c0_9, %c0_10, %c0_11] : memref<2x4x16x16xf32, #tpu.memory_space<vmem>>, vector<1x1x16x16xf32>
    %8 = vector.shape_cast %7 : vector<1x1x16x16xf32> to vector<16x16xf32>
    %9 = vector.shape_cast %6 : vector<16x16xf32> to vector<1x1x16x16xf32>
    tpu.vector_store %arg3[%c0_8, %c0_9, %c0_10, %c0_11], %9 {strides = array<i32>} : memref<2x4x16x16xf32, #tpu.memory_space<vmem>>, vector<1x1x16x16xf32>,
    %10 = vector.extract_strided_slice %0 {offsets = [0, 1, 0, 0], sizes = [1, 1, 8, 8], strides = [1, 1, 1, 1]} : vector<2x4x8x8xf32> to vector<1x1x8x8xf32>
    %11 = vector.shape_cast %10 : vector<1x1x8x8xf32> to vector<8x8xf32>
    %cst_12 = arith.constant dense<0.000000e+00> : vector<16x8xf32>
    %12 = tpu.matmul %1, %11, %cst_12 {dimension_numbers = #tpu.dot_dimension_numbers<[1], [0], [0], [1], [0, 0, 1, 1], [], []>} : vector<16x8xf32>, vector<8x8xf32>, vector<16x8xf32> -> vector<16x8xf32>
    %cst_13 = arith.constant dense<0.000000e+00> : vector<16x16xf32>
    %13 = tpu.matmul %12, %2, %cst_13 {dimension_numbers = #tpu.dot_dimension_numbers<[1], [0], [0], [1], [0, 0, 1, 1], [], []>} : vector<16x8xf32>, vector<8x16xf32>, vector<16x16xf32> -> vector<16x16xf32>
    %c0_14 = arith.constant 0 : index
    %c1 = arith.constant 1 : index
    %c0_15 = arith.constant 0 : index
    %c0_16 = arith.constant 0 : index
    %14 = vector.load %arg3[%c0_14, %c1, %c0_15, %c0_16] : memref<2x4x16x16xf32, #tpu.memory_space<vmem>>, vector<1x1x16x16xf32>
    %15 = vector.shape_cast %14 : vector<1x1x16x16xf32> to vector<16x16xf32>
    %16 = vector.shape_cast %13 : vector<16x16xf32> to vector<1x1x16x16xf32>
    tpu.vector_store %arg3[%c0_14, %c1, %c0_15, %c0_16], %16 {strides = array<i32>} : memref<2x4x16x16xf32, #tpu.memory_space<vmem>>, vector<1x1x16x16xf32>,
    %17 = vector.extract_strided_slice %0 {offsets = [0, 2, 0, 0], sizes = [1, 1, 8, 8], strides = [1, 1, 1, 1]} : vector<2x4x8x8xf32> to vector<1x1x8x8xf32>
    %18 = vector.shape_cast %17 : vector<1x1x8x8xf32> to vector<8x8xf32>
    %cst_17 = arith.constant dense<0.000000e+00> : vector<16x8xf32>
    %19 = tpu.matmul %1, %18, %cst_17 {dimension_numbers = #tpu.dot_dimension_numbers<[1], [0], [0], [1], [0, 0, 1, 1], [], []>} : vector<16x8xf32>, vector<8x8xf32>, vector<16x8xf32> -> vector<16x8xf32>
    %cst_18 = arith.constant dense<0.000000e+00> : vector<16x16xf32>
    %20 = tpu.matmul %19, %2, %cst_18 {dimension_numbers = #tpu.dot_dimension_numbers<[1], [0], [0], [1], [0, 0, 1, 1], [], []>} : vector<16x8xf32>, vector<8x16xf32>, vector<16x16xf32> -> vector<16x16xf32>
    %c0_19 = arith.constant 0 : index
    %c2 = arith.constant 2 : index
    %c0_20 = arith.constant 0 : index
    %c0_21 = arith.constant 0 : index
    %21 = vector.load %arg3[%c0_19, %c2, %c0_20, %c0_21] : memref<2x4x16x16xf32, #tpu.memory_space<vmem>>, vector<1x1x16x16xf32>
    %22 = vector.shape_cast %21 : vector<1x1x16x16xf32> to vector<16x16xf32>
    %23 = vector.shape_cast %20 : vector<16x16xf32> to vector<1x1x16x16xf32>
    tpu.vector_store %arg3[%c0_19, %c2, %c0_20, %c0_21], %23 {strides = array<i32>} : memref<2x4x16x16xf32, #tpu.memory_space<vmem>>, vector<1x1x16x16xf32>,
    %24 = vector.extract_strided_slice %0 {offsets = [0, 3, 0, 0], sizes = [1, 1, 8, 8], strides = [1, 1, 1, 1]} : vector<2x4x8x8xf32> to vector<1x1x8x8xf32>
    %25 = vector.shape_cast %24 : vector<1x1x8x8xf32> to vector<8x8xf32>
    %cst_22 = arith.constant dense<0.000000e+00> : vector<16x8xf32>
    %26 = tpu.matmul %1, %25, %cst_22 {dimension_numbers = #tpu.dot_dimension_numbers<[1], [0], [0], [1], [0, 0, 1, 1], [], []>} : vector<16x8xf32>, vector<8x8xf32>, vector<16x8xf32> -> vector<16x8xf32>
    %cst_23 = arith.constant dense<0.000000e+00> : vector<16x16xf32>
    %27 = tpu.matmul %26, %2, %cst_23 {dimension_numbers = #tpu.dot_dimension_numbers<[1], [0], [0], [1], [0, 0, 1, 1], [], []>} : vector<16x8xf32>, vector<8x16xf32>, vector<16x16xf32> -> vector<16x16xf32>
    %c0_24 = arith.constant 0 : index
    %c3 = arith.constant 3 : index
    %c0_25 = arith.constant 0 : index
    %c0_26 = arith.constant 0 : index
    %28 = vector.load %arg3[%c0_24, %c3, %c0_25, %c0_26] : memref<2x4x16x16xf32, #tpu.memory_space<vmem>>, vector<1x1x16x16xf32>
    %29 = vector.shape_cast %28 : vector<1x1x16x16xf32> to vector<16x16xf32>
    %30 = vector.shape_cast %27 : vector<16x16xf32> to vector<1x1x16x16xf32>
    tpu.vector_store %arg3[%c0_24, %c3, %c0_25, %c0_26], %30 {strides = array<i32>} : memref<2x4x16x16xf32, #tpu.memory_space<vmem>>, vector<1x1x16x16xf32>,
    %31 = vector.extract_strided_slice %0 {offsets = [1, 0, 0, 0], sizes = [1, 1, 8, 8], strides = [1, 1, 1, 1]} : vector<2x4x8x8xf32> to vector<1x1x8x8xf32>
    %32 = vector.shape_cast %31 : vector<1x1x8x8xf32> to vector<8x8xf32>
    %cst_27 = arith.constant dense<0.000000e+00> : vector<16x8xf32>
    %33 = tpu.matmul %1, %32, %cst_27 {dimension_numbers = #tpu.dot_dimension_numbers<[1], [0], [0], [1], [0, 0, 1, 1], [], []>} : vector<16x8xf32>, vector<8x8xf32>, vector<16x8xf32> -> vector<16x8xf32>
    %cst_28 = arith.constant dense<0.000000e+00> : vector<16x16xf32>
    %34 = tpu.matmul %33, %2, %cst_28 {dimension_numbers = #tpu.dot_dimension_numbers<[1], [0], [0], [1], [0, 0, 1, 1], [], []>} : vector<16x8xf32>, vector<8x16xf32>, vector<16x16xf32> -> vector<16x16xf32>
    %c1_29 = arith.constant 1 : index
    %c0_30 = arith.constant 0 : index
    %c0_31 = arith.constant 0 : index
    %c0_32 = arith.constant 0 : index
    %35 = vector.load %arg3[%c1_29, %c0_30, %c0_31, %c0_32] : memref<2x4x16x16xf32, #tpu.memory_space<vmem>>, vector<1x1x16x16xf32>
    %36 = vector.shape_cast %35 : vector<1x1x16x16xf32> to vector<16x16xf32>
    %37 = vector.shape_cast %34 : vector<16x16xf32> to vector<1x1x16x16xf32>
    tpu.vector_store %arg3[%c1_29, %c0_30, %c0_31, %c0_32], %37 {strides = array<i32>} : memref<2x4x16x16xf32, #tpu.memory_space<vmem>>, vector<1x1x16x16xf32>,
    %38 = vector.extract_strided_slice %0 {offsets = [1, 1, 0, 0], sizes = [1, 1, 8, 8], strides = [1, 1, 1, 1]} : vector<2x4x8x8xf32> to vector<1x1x8x8xf32>
    %39 = vector.shape_cast %38 : vector<1x1x8x8xf32> to vector<8x8xf32>
    %cst_33 = arith.constant dense<0.000000e+00> : vector<16x8xf32>
    %40 = tpu.matmul %1, %39, %cst_33 {dimension_numbers = #tpu.dot_dimension_numbers<[1], [0], [0], [1], [0, 0, 1, 1], [], []>} : vector<16x8xf32>, vector<8x8xf32>, vector<16x8xf32> -> vector<16x8xf32>
    %cst_34 = arith.constant dense<0.000000e+00> : vector<16x16xf32>
    %41 = tpu.matmul %40, %2, %cst_34 {dimension_numbers = #tpu.dot_dimension_numbers<[1], [0], [0], [1], [0, 0, 1, 1], [], []>} : vector<16x8xf32>, vector<8x16xf32>, vector<16x16xf32> -> vector<16x16xf32>
    %c1_35 = arith.constant 1 : index
    %c1_36 = arith.constant 1 : index
    %c0_37 = arith.constant 0 : index
    %c0_38 = arith.constant 0 : index
    %42 = vector.load %arg3[%c1_35, %c1_36, %c0_37, %c0_38] : memref<2x4x16x16xf32, #tpu.memory_space<vmem>>, vector<1x1x16x16xf32>
    %43 = vector.shape_cast %42 : vector<1x1x16x16xf32> to vector<16x16xf32>
    %44 = vector.shape_cast %41 : vector<16x16xf32> to vector<1x1x16x16xf32>
    tpu.vector_store %arg3[%c1_35, %c1_36, %c0_37, %c0_38], %44 {strides = array<i32>} : memref<2x4x16x16xf32, #tpu.memory_space<vmem>>, vector<1x1x16x16xf32>,
    %45 = vector.extract_strided_slice %0 {offsets = [1, 2, 0, 0], sizes = [1, 1, 8, 8], strides = [1, 1, 1, 1]} : vector<2x4x8x8xf32> to vector<1x1x8x8xf32>
    %46 = vector.shape_cast %45 : vector<1x1x8x8xf32> to vector<8x8xf32>
    %cst_39 = arith.constant dense<0.000000e+00> : vector<16x8xf32>
    %47 = tpu.matmul %1, %46, %cst_39 {dimension_numbers = #tpu.dot_dimension_numbers<[1], [0], [0], [1], [0, 0, 1, 1], [], []>} : vector<16x8xf32>, vector<8x8xf32>, vector<16x8xf32> -> vector<16x8xf32>
    %cst_40 = arith.constant dense<0.000000e+00> : vector<16x16xf32>
    %48 = tpu.matmul %47, %2, %cst_40 {dimension_numbers = #tpu.dot_dimension_numbers<[1], [0], [0], [1], [0, 0, 1, 1], [], []>} : vector<16x8xf32>, vector<8x16xf32>, vector<16x16xf32> -> vector<16x16xf32>
    %c1_41 = arith.constant 1 : index
    %c2_42 = arith.constant 2 : index
    %c0_43 = arith.constant 0 : index
    %c0_44 = arith.constant 0 : index
    %49 = vector.load %arg3[%c1_41, %c2_42, %c0_43, %c0_44] : memref<2x4x16x16xf32, #tpu.memory_space<vmem>>, vector<1x1x16x16xf32>
    %50 = vector.shape_cast %49 : vector<1x1x16x16xf32> to vector<16x16xf32>
    %51 = vector.shape_cast %48 : vector<16x16xf32> to vector<1x1x16x16xf32>
    tpu.vector_store %arg3[%c1_41, %c2_42, %c0_43, %c0_44], %51 {strides = array<i32>} : memref<2x4x16x16xf32, #tpu.memory_space<vmem>>, vector<1x1x16x16xf32>,
    %52 = vector.extract_strided_slice %0 {offsets = [1, 3, 0, 0], sizes = [1, 1, 8, 8], strides = [1, 1, 1, 1]} : vector<2x4x8x8xf32> to vector<1x1x8x8xf32>
    %53 = vector.shape_cast %52 : vector<1x1x8x8xf32> to vector<8x8xf32>
    %cst_45 = arith.constant dense<0.000000e+00> : vector<16x8xf32>
    %54 = tpu.matmul %1, %53, %cst_45 {dimension_numbers = #tpu.dot_dimension_numbers<[1], [0], [0], [1], [0, 0, 1, 1], [], []>} : vector<16x8xf32>, vector<8x8xf32>, vector<16x8xf32> -> vector<16x8xf32>
    %cst_46 = arith.constant dense<0.000000e+00> : vector<16x16xf32>
    %55 = tpu.matmul %54, %2, %cst_46 {dimension_numbers = #tpu.dot_dimension_numbers<[1], [0], [0], [1], [0, 0, 1, 1], [], []>} : vector<16x8xf32>, vector<8x16xf32>, vector<16x16xf32> -> vector<16x16xf32>
    %c1_47 = arith.constant 1 : index
    %c3_48 = arith.constant 3 : index
    %c0_49 = arith.constant 0 : index
    %c0_50 = arith.constant 0 : index
    %56 = vector.load %arg3[%c1_47, %c3_48, %c0_49, %c0_50] : memref<2x4x16x16xf32, #tpu.memory_space<vmem>>, vector<1x1x16x16xf32>
    %57 = vector.shape_cast %56 : vector<1x1x16x16xf32> to vector<16x16xf32>
    %58 = vector.shape_cast %55 : vector<16x16xf32> to vector<1x1x16x16xf32>
    tpu.vector_store %arg3[%c1_47, %c3_48, %c0_49, %c0_50], %58 {strides = array<i32>} : memref<2x4x16x16xf32, #tpu.memory_space<vmem>>, vector<1x1x16x16xf32>,
    return
  }
}

</mosaic_0001>

<llo_original>
// kernel: tpu_custom_call.1
$region0: #{tpu_custom_call.1}
  #allocation0 [shape = 'u32[]', space=smem, size = 0x4, offset = 0x4, fixed_abs, tag = 'smem constant byte address 0x4 - core index']
  #allocation1 [shape = 'u32[144,128]{1,0:T(1,128)}', space=vmem, size = 0x12000, scoped, tag = 'internal scratch']
  %s0 = inlined_call_operand.hbm [shape: f32[2,4,8,8], index: 0, kind: input, shape index: {}]
  %s1 = inlined_call_operand.vmem [shape: f32[16,8], index: 1, kind: input, shape index: {}]
  %s2 = inlined_call_operand.vmem [shape: f32[8,16], index: 2, kind: input, shape index: {}]
  %s3 = inlined_call_operand.hbm [shape: f32[2,4,16,16], index: 3, kind: output, shape index: {}]
  %s4 = sld [smem:[#allocation0]]
  $region26: #{tpu_custom_call.1} parent=0
    _
  %s6 = ssub.s32 1, %s4
  %s7 = scalar_select 0, %s6, %s4
  $region1: #{tpu_custom_call.1} parent=0
    #allocation2 [shape = 'u8[32768]{0}', space=vmem, size = 0x8000, scoped, tag = 'input window, operand 0, single buffered']
    #allocation3 [shape = 's32[1]{0}', space=sflag, size = 0x4, scoped, tag = 'scoped memory for tpu_custom_call.1']
    #allocation4 [shape = 's32[1]{0}', space=sflag, size = 0x4, scoped, tag = 'scoped memory for tpu_custom_call.1']
    #allocation5 [shape = 'u8[65536]{0}', space=vmem, size = 0x10000, scoped, tag = 'output window, operand 0, single buffered']
    %8 = vsyncpa [#allocation3], 0
    %9 = vsyncpa [#allocation4], 0
    // Predicated region
    $region2: #{tpu_custom_call.1} parent=1 // pred_check
      _
    $region3: #{tpu_custom_call.1} parent=1 // pred_check_branch
      %11 = sbr.rel (0) target = $region5
    $region4: #{tpu_custom_call.1} parent=1 // pred_region
      %s13 = ssub.s32 1024, 1024
      %14 = vsyncadd [#allocation3], %s13
      %s15 = sshll.u32 [#allocation2], 4
      %s16 = int_to_ptr.vmem [resolvable:$true] %s15
      %21 = dma.hbm_to_vmem [thread:$0]  %s0, 1024, %s16, [#allocation3], 128, 128, 8
    $region5: #{tpu_custom_call.1} parent=1 // pred_fallthru
      _
    // Predicated region
    $region6: #{tpu_custom_call.1} parent=1 // pred_check
      _
    $region7: #{tpu_custom_call.1} parent=1 // pred_check_branch
      %23 = sbr.rel (0) target = $region9
    $region8: #{tpu_custom_call.1} parent=1 // pred_region
      _
    $region9: #{tpu_custom_call.1} parent=1 // pred_fallthru
      _
    // Predicated region
    $region10: #{tpu_custom_call.1} parent=1 // pred_check
      _
    $region11: #{tpu_custom_call.1} parent=1 // pred_check_branch
      %25 = sbr.rel (0) target = $region13
    $region12: #{tpu_custom_call.1} parent=1 // pred_region
      _
    $region13: #{tpu_custom_call.1} parent=1 // pred_fallthru
      _
    // Predicated region
    $region14: #{tpu_custom_call.1} parent=1 // pred_check
      _
    $region15: #{tpu_custom_call.1} parent=1 // pred_check_branch
      %27 = sbr.rel (0) target = $region17
    $region16: #{tpu_custom_call.1} parent=1 // pred_region
      %28 = dma.done [#allocation3], 1024
    $region17: #{tpu_custom_call.1} parent=1 // pred_fallthru
      _
    %v29 = vld [vmem:[#allocation2] sm:$0xff]
    %v30 = vld [vmem:[#allocation2 + $0x8] sm:$0xff]
    %v31 = vld [vmem:[#allocation2 + $0x10] sm:$0xff]
    %v32 = vld [vmem:[#allocation2 + $0x18] sm:$0xff]
    %v33 = vld [vmem:[#allocation2 + $0x20] sm:$0xff]
    %v34 = vld [vmem:[#allocation2 + $0x28] sm:$0xff]
    %v35 = vld [vmem:[#allocation2 + $0x30] sm:$0xff]
    %v36 = vld [vmem:[#allocation2 + $0x38] sm:$0xff]
    %v37 = vld [vmem:[%s1] sm:$0xff]
    %v38 = vld [vmem:[%s1 + $0x8] sm:$0xff]
    %v39 = vld [vmem:[%s2] sm:$0xff]
    %vm40 = vcmask 64512
    %v42 = vsel %vm40, %v37, 0
    %v45 = vsel %vm40, %v38, 0
    %47 = vmatprep.subr.mxu0 0.0
    %48 = vmatpush1.msra.mxu0 %v29
    %49 = vmatprep.subr.mxu0 0.0
    %50 = vmatpush1.msra.mxu0 0.0
    %51 = vmatprep.subr.mxu0 0.0
    %52 = vmatpush1.msra.mxu0 0.0
    %53 = vmatprep.subr.mxu0 0.0
    %54 = vmatpush1.msra.mxu0 0.0
    %55 = vmatprep.subr.mxu0 0.0
    %56 = vmatpush1.msra.mxu0 0.0
    %57 = vmatprep.subr.mxu0 0.0
    %58 = vmatpush1.msra.mxu0 0.0
    %59 = vmatprep.subr.mxu0 0.0
    %60 = vmatpush1.msra.mxu0 0.0
    %61 = vmatprep.subr.mxu0 0.0
    %62 = vmatpush1.msra.mxu0 0.0
    %63 = vmatprep.subr.mxu0 0.0
    %64 = vmatpush1.msra.mxu0 0.0
    %65 = vmatprep.subr.mxu0 0.0
    %66 = vmatpush1.msra.mxu0 0.0
    %67 = vmatprep.subr.mxu0 0.0
    %68 = vmatpush1.msra.mxu0 0.0
    %69 = vmatprep.subr.mxu0 0.0
    %70 = vmatpush1.msra.mxu0 0.0
    %71 = vmatprep.subr.mxu0 0.0
    %72 = vmatpush1.msra.mxu0 0.0
    %73 = vmatprep.subr.mxu0 0.0
    %74 = vmatpush1.msra.mxu0 0.0
    %75 = vmatprep.subr.mxu0 0.0
    %76 = vmatpush1.msra.mxu0 0.0
    %77 = vmatprep.subr.mxu0 0.0
    %78 = vmatpush1.msra.mxu0 0.0
    %79 = vmatprep.subr.mxu0 0.0
    %80 = vmatpush1.msra.mxu0 0.0
    %81 = vmatprep.subr.mxu0 0.0
    %82 = vmatpush1.msra.mxu0 0.0
    %83 = vmatprep.subr.mxu0 0.0
    %84 = vmatpush1.msra.mxu0 0.0
    %85 = vmatprep.subr.mxu0 0.0
    %86 = vmatpush1.msra.mxu0 0.0
    %87 = vmatprep.subr.mxu0 0.0
    %88 = vmatpush1.msra.mxu0 0.0
    %89 = vmatprep.subr.mxu0 0.0
    %90 = vmatpush1.msra.mxu0 0.0
    %91 = vmatprep.subr.mxu0 0.0
    %92 = vmatpush1.msra.mxu0 0.0
    %93 = vmatprep.subr.mxu0 0.0
    %94 = vmatpush1.msra.mxu0 0.0
    %95 = vmatprep.subr.mxu0 0.0
    %96 = vmatpush1.msra.mxu0 0.0
    %97 = vmatprep.subr.mxu0 0.0
    %98 = vmatpush1.msra.mxu0 0.0
    %99 = vmatprep.subr.mxu0 0.0
    %100 = vmatpush1.msra.mxu0 0.0
    %101 = vmatprep.subr.mxu0 0.0
    %102 = vmatpush1.msra.mxu0 0.0
    %103 = vmatprep.subr.mxu0 0.0
    %104 = vmatpush1.msra.mxu0 0.0
    %105 = vmatprep.subr.mxu0 0.0
    %106 = vmatpush1.msra.mxu0 0.0
    %107 = vmatprep.subr.mxu0 0.0
    %108 = vmatpush1.msra.mxu0 0.0
    %109 = vmatprep.subr.mxu0 0.0
    %110 = vmatpush1.msra.mxu0 0.0
    %111 = vmatprep.mubr.f32.mxu0 0.0
    %112 = vmatmul.mubr.f32.gmra.mrb[0].mxu0 %v42
    %v113 = vpop.f32.mrb[0].mxu0
    %v114 = vadd.f32 0.0, %v113
    %v115 = vpop.f32.mrb[0].mxu0
    %116 = vmatprep.mubr.f32.mxu0 0.0
    %117 = vmatmul.mubr.f32.gmra.mrb[0].mxu0 %v45
    %v118 = vpop.f32.mrb[0].mxu0
    %v119 = vadd.f32 0.0, %v118
    %v120 = vpop.f32.mrb[0].mxu0
    %121 = vdwg.mxu0
    %v123 = vsel %vm40, %v114, 0
    %v126 = vsel %vm40, %v119, 0
    %128 = vmatprep.subr.mxu0 0.0
    %129 = vmatpush1.msra.mxu0 %v39
    %130 = vmatprep.subr.mxu0 0.0
    %131 = vmatpush1.msra.mxu0 0.0
    %132 = vmatprep.subr.mxu0 0.0
    %133 = vmatpush1.msra.mxu0 0.0
    %134 = vmatprep.subr.mxu0 0.0
    %135 = vmatpush1.msra.mxu0 0.0
    %136 = vmatprep.subr.mxu0 0.0
    %137 = vmatpush1.msra.mxu0 0.0
    %138 = vmatprep.subr.mxu0 0.0
    %139 = vmatpush1.msra.mxu0 0.0
    %140 = vmatprep.subr.mxu0 0.0
    %141 = vmatpush1.msra.mxu0 0.0
    %142 = vmatprep.subr.mxu0 0.0
    %143 = vmatpush1.msra.mxu0 0.0
    %144 = vmatprep.subr.mxu0 0.0
    %145 = vmatpush1.msra.mxu0 0.0
    %146 = vmatprep.subr.mxu0 0.0
    %147 = vmatpush1.msra.mxu0 0.0
    %148 = vmatprep.subr.mxu0 0.0
    %149 = vmatpush1.msra.mxu0 0.0
    %150 = vmatprep.subr.mxu0 0.0
    %151 = vmatpush1.msra.mxu0 0.0
    %152 = vmatprep.subr.mxu0 0.0
    %153 = vmatpush1.msra.mxu0 0.0
    %154 = vmatprep.subr.mxu0 0.0
    %155 = vmatpush1.msra.mxu0 0.0
    %156 = vmatprep.subr.mxu0 0.0
    %157 = vmatpush1.msra.mxu0 0.0
    %158 = vmatprep.subr.mxu0 0.0
    %159 = vmatpush1.msra.mxu0 0.0
    %160 = vmatprep.subr.mxu0 0.0
    %161 = vmatpush1.msra.mxu0 0.0
    %162 = vmatprep.subr.mxu0 0.0
    %163 = vmatpush1.msra.mxu0 0.0
    %164 = vmatprep.subr.mxu0 0.0
    %165 = vmatpush1.msra.mxu0 0.0
    %166 = vmatprep.subr.mxu0 0.0
    %167 = vmatpush1.msra.mxu0 0.0
    %168 = vmatprep.subr.mxu0 0.0
    %169 = vmatpush1.msra.mxu0 0.0
    %170 = vmatprep.subr.mxu0 0.0
    %171 = vmatpush1.msra.mxu0 0.0
    %172 = vmatprep.subr.mxu0 0.0
    %173 = vmatpush1.msra.mxu0 0.0
    %174 = vmatprep.subr.mxu0 0.0
    %175 = vmatpush1.msra.mxu0 0.0
    %176 = vmatprep.subr.mxu0 0.0
    %177 = vmatpush1.msra.mxu0 0.0
    %178 = vmatprep.subr.mxu0 0.0
    %179 = vmatpush1.msra.mxu0 0.0
    %180 = vmatprep.subr.mxu0 0.0
    %181 = vmatpush1.msra.mxu0 0.0
    %182 = vmatprep.subr.mxu0 0.0
    %183 = vmatpush1.msra.mxu0 0.0
    %184 = vmatprep.subr.mxu0 0.0
    %185 = vmatpush1.msra.mxu0 0.0
    %186 = vmatprep.subr.mxu0 0.0
    %187 = vmatpush1.msra.mxu0 0.0
    %188 = vmatprep.subr.mxu0 0.0
    %189 = vmatpush1.msra.mxu0 0.0
    %190 = vmatprep.subr.mxu0 0.0
    %191 = vmatpush1.msra.mxu0 0.0
    %192 = vmatprep.mubr.f32.mxu0 0.0
    %193 = vmatmul.mubr.f32.gmra.mrb[0].mxu0 %v123
    %v194 = vpop.f32.mrb[0].mxu0
    %v195 = vadd.f32 0.0, %v194
    %v196 = vpop.f32.mrb[0].mxu0
    %197 = vmatprep.mubr.f32.mxu0 0.0
    %198 = vmatmul.mubr.f32.gmra.mrb[0].mxu0 %v126
    %v199 = vpop.f32.mrb[0].mxu0
    %v200 = vadd.f32 0.0, %v199
    %v201 = vpop.f32.mrb[0].mxu0
    %202 = vdwg.mxu0
    %vm203 = vcmask 130048
    %204 = vst.msk [vmem:[#allocation5] sm:$0xff] %vm203, %v195
    %205 = vst.msk [vmem:[#allocation5 + $0x8] sm:$0xff] %vm203, %v200
    %206 = vmatprep.subr.mxu0 0.0
    %207 = vmatpush1.msra.mxu0 %v30
    %208 = vmatprep.subr.mxu0 0.0
    %209 = vmatpush1.msra.mxu0 0.0
    %210 = vmatprep.subr.mxu0 0.0
    %211 = vmatpush1.msra.mxu0 0.0
    %212 = vmatprep.subr.mxu0 0.0
    %213 = vmatpush1.msra.mxu0 0.0
    %214 = vmatprep.subr.mxu0 0.0
    %215 = vmatpush1.msra.mxu0 0.0
    %216 = vmatprep.subr.mxu0 0.0
    %217 = vmatpush1.msra.mxu0 0.0
    %218 = vmatprep.subr.mxu0 0.0
    %219 = vmatpush1.msra.mxu0 0.0
    %220 = vmatprep.subr.mxu0 0.0
    %221 = vmatpush1.msra.mxu0 0.0
    %222 = vmatprep.subr.mxu0 0.0
    %223 = vmatpush1.msra.mxu0 0.0
    %224 = vmatprep.subr.mxu0 0.0
    %225 = vmatpush1.msra.mxu0 0.0
    %226 = vmatprep.subr.mxu0 0.0
    %227 = vmatpush1.msra.mxu0 0.0
    %228 = vmatprep.subr.mxu0 0.0
    %229 = vmatpush1.msra.mxu0 0.0
    %230 = vmatprep.subr.mxu0 0.0
    %231 = vmatpush1.msra.mxu0 0.0
    %232 = vmatprep.subr.mxu0 0.0
    %233 = vmatpush1.msra.mxu0 0.0
    %234 = vmatprep.subr.mxu0 0.0
    %235 = vmatpush1.msra.mxu0 0.0
    %236 = vmatprep.subr.mxu0 0.0
    %237 = vmatpush1.msra.mxu0 0.0
    %238 = vmatprep.subr.mxu0 0.0
    %239 = vmatpush1.msra.mxu0 0.0
    %240 = vmatprep.subr.mxu0 0.0
    %241 = vmatpush1.msra.mxu0 0.0
    %242 = vmatprep.subr.mxu0 0.0
    %243 = vmatpush1.msra.mxu0 0.0
    %244 = vmatprep.subr.mxu0 0.0
    %245 = vmatpush1.msra.mxu0 0.0
    %246 = vmatprep.subr.mxu0 0.0
    %247 = vmatpush1.msra.mxu0 0.0
    %248 = vmatprep.subr.mxu0 0.0
    %249 = vmatpush1.msra.mxu0 0.0
    %250 = vmatprep.subr.mxu0 0.0
    %251 = vmatpush1.msra.mxu0 0.0
    %252 = vmatprep.subr.mxu0 0.0
    %253 = vmatpush1.msra.mxu0 0.0
    %254 = vmatprep.subr.mxu0 0.0
    %255 = vmatpush1.msra.mxu0 0.0
    %256 = vmatprep.subr.mxu0 0.0
    %257 = vmatpush1.msra.mxu0 0.0
    %258 = vmatprep.subr.mxu0 0.0
    %259 = vmatpush1.msra.mxu0 0.0
    %260 = vmatprep.subr.mxu0 0.0
    %261 = vmatpush1.msra.mxu0 0.0
    %262 = vmatprep.subr.mxu0 0.0
    %263 = vmatpush1.msra.mxu0 0.0
    %264 = vmatprep.subr.mxu0 0.0
    %265 = vmatpush1.msra.mxu0 0.0
    %266 = vmatprep.subr.mxu0 0.0
    %267 = vmatpush1.msra.mxu0 0.0
    %268 = vmatprep.subr.mxu0 0.0
    %269 = vmatpush1.msra.mxu0 0.0
    %270 = vmatprep.mubr.f32.mxu0 0.0
    %271 = vmatmul.mubr.f32.gmra.mrb[0].mxu0 %v42
    %v272 = vpop.f32.mrb[0].mxu0
    %v273 = vadd.f32 0.0, %v272
    %v274 = vpop.f32.mrb[0].mxu0
    %275 = vmatprep.mubr.f32.mxu0 0.0
    %276 = vmatmul.mubr.f32.gmra.mrb[0].mxu0 %v45
    %v277 = vpop.f32.mrb[0].mxu0
    %v278 = vadd.f32 0.0, %v277
    %v279 = vpop.f32.mrb[0].mxu0
    %280 = vdwg.mxu0
    %v282 = vsel %vm40, %v273, 0
    %v285 = vsel %vm40, %v278, 0
    %287 = vmatprep.subr.mxu0 0.0
    %288 = vmatpush1.msra.mxu0 %v39
    %289 = vmatprep.subr.mxu0 0.0
    %290 = vmatpush1.msra.mxu0 0.0
    %291 = vmatprep.subr.mxu0 0.0
    %292 = vmatpush1.msra.mxu0 0.0
    %293 = vmatprep.subr.mxu0 0.0
    %294 = vmatpush1.msra.mxu0 0.0
    %295 = vmatprep.subr.mxu0 0.0
    %296 = vmatpush1.msra.mxu0 0.0
    %297 = vmatprep.subr.mxu0 0.0
    %298 = vmatpush1.msra.mxu0 0.0
    %299 = vmatprep.subr.mxu0 0.0
    %300 = vmatpush1.msra.mxu0 0.0
    %301 = vmatprep.subr.mxu0 0.0
    %302 = vmatpush1.msra.mxu0 0.0
    %303 = vmatprep.subr.mxu0 0.0
    %304 = vmatpush1.msra.mxu0 0.0
    %305 = vmatprep.subr.mxu0 0.0
    %306 = vmatpush1.msra.mxu0 0.0
    %307 = vmatprep.subr.mxu0 0.0
    %308 = vmatpush1.msra.mxu0 0.0
    %309 = vmatprep.subr.mxu0 0.0
    %310 = vmatpush1.msra.mxu0 0.0
    %311 = vmatprep.subr.mxu0 0.0
    %312 = vmatpush1.msra.mxu0 0.0
    %313 = vmatprep.subr.mxu0 0.0
    %314 = vmatpush1.msra.mxu0 0.0
    %315 = vmatprep.subr.mxu0 0.0
    %316 = vmatpush1.msra.mxu0 0.0
    %317 = vmatprep.subr.mxu0 0.0
    %318 = vmatpush1.msra.mxu0 0.0
    %319 = vmatprep.subr.mxu0 0.0
    %320 = vmatpush1.msra.mxu0 0.0
    %321 = vmatprep.subr.mxu0 0.0
    %322 = vmatpush1.msra.mxu0 0.0
    %323 = vmatprep.subr.mxu0 0.0
    %324 = vmatpush1.msra.mxu0 0.0
    %325 = vmatprep.subr.mxu0 0.0
    %326 = vmatpush1.msra.mxu0 0.0
    %327 = vmatprep.subr.mxu0 0.0
    %328 = vmatpush1.msra.mxu0 0.0
    %329 = vmatprep.subr.mxu0 0.0
    %330 = vmatpush1.msra.mxu0 0.0
    %331 = vmatprep.subr.mxu0 0.0
    %332 = vmatpush1.msra.mxu0 0.0
    %333 = vmatprep.subr.mxu0 0.0
    %334 = vmatpush1.msra.mxu0 0.0
    %335 = vmatprep.subr.mxu0 0.0
    %336 = vmatpush1.msra.mxu0 0.0
    %337 = vmatprep.subr.mxu0 0.0
    %338 = vmatpush1.msra.mxu0 0.0
    %339 = vmatprep.subr.mxu0 0.0
    %340 = vmatpush1.msra.mxu0 0.0
    %341 = vmatprep.subr.mxu0 0.0
    %342 = vmatpush1.msra.mxu0 0.0
    %343 = vmatprep.subr.mxu0 0.0
    %344 = vmatpush1.msra.mxu0 0.0
    %345 = vmatprep.subr.mxu0 0.0
    %346 = vmatpush1.msra.mxu0 0.0
    %347 = vmatprep.subr.mxu0 0.0
    %348 = vmatpush1.msra.mxu0 0.0
    %349 = vmatprep.subr.mxu0 0.0
    %350 = vmatpush1.msra.mxu0 0.0
    %351 = vmatprep.mubr.f32.mxu0 0.0
    %352 = vmatmul.mubr.f32.gmra.mrb[0].mxu0 %v282
    %v353 = vpop.f32.mrb[0].mxu0
    %v354 = vadd.f32 0.0, %v353
    %v355 = vpop.f32.mrb[0].mxu0
    %356 = vmatprep.mubr.f32.mxu0 0.0
    %357 = vmatmul.mubr.f32.gmra.mrb[0].mxu0 %v285
    %v358 = vpop.f32.mrb[0].mxu0
    %v359 = vadd.f32 0.0, %v358
    %v360 = vpop.f32.mrb[0].mxu0
    %361 = vdwg.mxu0
    %s362 = scalar_lea.vmem [#allocation5], 16
    %363 = vst.msk [vmem:[%s362] sm:$0xff] %vm203, %v354
    %364 = vst.msk [vmem:[%s362 + $0x8] sm:$0xff] %vm203, %v359
    %365 = vmatprep.subr.mxu0 0.0
    %366 = vmatpush1.msra.mxu0 %v31
    %367 = vmatprep.subr.mxu0 0.0
    %368 = vmatpush1.msra.mxu0 0.0
    %369 = vmatprep.subr.mxu0 0.0
    %370 = vmatpush1.msra.mxu0 0.0
    %371 = vmatprep.subr.mxu0 0.0
    %372 = vmatpush1.msra.mxu0 0.0
    %373 = vmatprep.subr.mxu0 0.0
    %374 = vmatpush1.msra.mxu0 0.0
    %375 = vmatprep.subr.mxu0 0.0
    %376 = vmatpush1.msra.mxu0 0.0
    %377 = vmatprep.subr.mxu0 0.0
    %378 = vmatpush1.msra.mxu0 0.0
    %379 = vmatprep.subr.mxu0 0.0
    %380 = vmatpush1.msra.mxu0 0.0
    %381 = vmatprep.subr.mxu0 0.0
    %382 = vmatpush1.msra.mxu0 0.0
    %383 = vmatprep.subr.mxu0 0.0
    %384 = vmatpush1.msra.mxu0 0.0
    %385 = vmatprep.subr.mxu0 0.0
    %386 = vmatpush1.msra.mxu0 0.0
    %387 = vmatprep.subr.mxu0 0.0
    %388 = vmatpush1.msra.mxu0 0.0
    %389 = vmatprep.subr.mxu0 0.0
    %390 = vmatpush1.msra.mxu0 0.0
    %391 = vmatprep.subr.mxu0 0.0
    %392 = vmatpush1.msra.mxu0 0.0
    %393 = vmatprep.subr.mxu0 0.0
    %394 = vmatpush1.msra.mxu0 0.0
    %395 = vmatprep.subr.mxu0 0.0
    %396 = vmatpush1.msra.mxu0 0.0
    %397 = vmatprep.subr.mxu0 0.0
    %398 = vmatpush1.msra.mxu0 0.0
    %399 = vmatprep.subr.mxu0 0.0
    %400 = vmatpush1.msra.mxu0 0.0
    %401 = vmatprep.subr.mxu0 0.0
    %402 = vmatpush1.msra.mxu0 0.0
    %403 = vmatprep.subr.mxu0 0.0
    %404 = vmatpush1.msra.mxu0 0.0
    %405 = vmatprep.subr.mxu0 0.0
    %406 = vmatpush1.msra.mxu0 0.0
    %407 = vmatprep.subr.mxu0 0.0
    %408 = vmatpush1.msra.mxu0 0.0
    %409 = vmatprep.subr.mxu0 0.0
    %410 = vmatpush1.msra.mxu0 0.0
    %411 = vmatprep.subr.mxu0 0.0
    %412 = vmatpush1.msra.mxu0 0.0
    %413 = vmatprep.subr.mxu0 0.0
    %414 = vmatpush1.msra.mxu0 0.0
    %415 = vmatprep.subr.mxu0 0.0
    %416 = vmatpush1.msra.mxu0 0.0
    %417 = vmatprep.subr.mxu0 0.0
    %418 = vmatpush1.msra.mxu0 0.0
    %419 = vmatprep.subr.mxu0 0.0
    %420 = vmatpush1.msra.mxu0 0.0
    %421 = vmatprep.subr.mxu0 0.0
    %422 = vmatpush1.msra.mxu0 0.0
    %423 = vmatprep.subr.mxu0 0.0
    %424 = vmatpush1.msra.mxu0 0.0
    %425 = vmatprep.subr.mxu0 0.0
    %426 = vmatpush1.msra.mxu0 0.0
    %427 = vmatprep.subr.mxu0 0.0
    %428 = vmatpush1.msra.mxu0 0.0
    %429 = vmatprep.mubr.f32.mxu0 0.0
    %430 = vmatmul.mubr.f32.gmra.mrb[0].mxu0 %v42
    %v431 = vpop.f32.mrb[0].mxu0
    %v432 = vadd.f32 0.0, %v431
    %v433 = vpop.f32.mrb[0].mxu0
    %434 = vmatprep.mubr.f32.mxu0 0.0
    %435 = vmatmul.mubr.f32.gmra.mrb[0].mxu0 %v45
    %v436 = vpop.f32.mrb[0].mxu0
    %v437 = vadd.f32 0.0, %v436
    %v438 = vpop.f32.mrb[0].mxu0
    %439 = vdwg.mxu0
    %v441 = vsel %vm40, %v432, 0
    %v444 = vsel %vm40, %v437, 0
    %446 = vmatprep.subr.mxu0 0.0
    %447 = vmatpush1.msra.mxu0 %v39
    %448 = vmatprep.subr.mxu0 0.0
    %449 = vmatpush1.msra.mxu0 0.0
    %450 = vmatprep.subr.mxu0 0.0
    %451 = vmatpush1.msra.mxu0 0.0
    %452 = vmatprep.subr.mxu0 0.0
    %453 = vmatpush1.msra.mxu0 0.0
    %454 = vmatprep.subr.mxu0 0.0
    %455 = vmatpush1.msra.mxu0 0.0
    %456 = vmatprep.subr.mxu0 0.0
    %457 = vmatpush1.msra.mxu0 0.0
    %458 = vmatprep.subr.mxu0 0.0
    %459 = vmatpush1.msra.mxu0 0.0
    %460 = vmatprep.subr.mxu0 0.0
    %461 = vmatpush1.msra.mxu0 0.0
    %462 = vmatprep.subr.mxu0 0.0
    %463 = vmatpush1.msra.mxu0 0.0
    %464 = vmatprep.subr.mxu0 0.0
    %465 = vmatpush1.msra.mxu0 0.0
    %466 = vmatprep.subr.mxu0 0.0
    %467 = vmatpush1.msra.mxu0 0.0
    %468 = vmatprep.subr.mxu0 0.0
    %469 = vmatpush1.msra.mxu0 0.0
    %470 = vmatprep.subr.mxu0 0.0
    %471 = vmatpush1.msra.mxu0 0.0
    %472 = vmatprep.subr.mxu0 0.0
    %473 = vmatpush1.msra.mxu0 0.0
    %474 = vmatprep.subr.mxu0 0.0
    %475 = vmatpush1.msra.mxu0 0.0
    %476 = vmatprep.subr.mxu0 0.0
    %477 = vmatpush1.msra.mxu0 0.0
    %478 = vmatprep.subr.mxu0 0.0
    %479 = vmatpush1.msra.mxu0 0.0
    %480 = vmatprep.subr.mxu0 0.0
    %481 = vmatpush1.msra.mxu0 0.0
    %482 = vmatprep.subr.mxu0 0.0
    %483 = vmatpush1.msra.mxu0 0.0
    %484 = vmatprep.subr.mxu0 0.0
    %485 = vmatpush1.msra.mxu0 0.0
    %486 = vmatprep.subr.mxu0 0.0
    %487 = vmatpush1.msra.mxu0 0.0
    %488 = vmatprep.subr.mxu0 0.0
    %489 = vmatpush1.msra.mxu0 0.0
    %490 = vmatprep.subr.mxu0 0.0
    %491 = vmatpush1.msra.mxu0 0.0
    %492 = vmatprep.subr.mxu0 0.0
    %493 = vmatpush1.msra.mxu0 0.0
    %494 = vmatprep.subr.mxu0 0.0
    %495 = vmatpush1.msra.mxu0 0.0
    %496 = vmatprep.subr.mxu0 0.0
    %497 = vmatpush1.msra.mxu0 0.0
    %498 = vmatprep.subr.mxu0 0.0
    %499 = vmatpush1.msra.mxu0 0.0
    %500 = vmatprep.subr.mxu0 0.0
    %501 = vmatpush1.msra.mxu0 0.0
    %502 = vmatprep.subr.mxu0 0.0
    %503 = vmatpush1.msra.mxu0 0.0
    %504 = vmatprep.subr.mxu0 0.0
    %505 = vmatpush1.msra.mxu0 0.0
    %506 = vmatprep.subr.mxu0 0.0
    %507 = vmatpush1.msra.mxu0 0.0
    %508 = vmatprep.subr.mxu0 0.0
    %509 = vmatpush1.msra.mxu0 0.0
    %510 = vmatprep.mubr.f32.mxu0 0.0
    %511 = vmatmul.mubr.f32.gmra.mrb[0].mxu0 %v441
    %v512 = vpop.f32.mrb[0].mxu0
    %v513 = vadd.f32 0.0, %v512
    %v514 = vpop.f32.mrb[0].mxu0
    %515 = vmatprep.mubr.f32.mxu0 0.0
    %516 = vmatmul.mubr.f32.gmra.mrb[0].mxu0 %v444
    %v517 = vpop.f32.mrb[0].mxu0
    %v518 = vadd.f32 0.0, %v517
    %v519 = vpop.f32.mrb[0].mxu0
    %520 = vdwg.mxu0
    %s521 = scalar_lea.vmem [#allocation5], 32
    %522 = vst.msk [vmem:[%s521] sm:$0xff] %vm203, %v513
    %523 = vst.msk [vmem:[%s521 + $0x8] sm:$0xff] %vm203, %v518
    %524 = vmatprep.subr.mxu0 0.0
    %525 = vmatpush1.msra.mxu0 %v32
    %526 = vmatprep.subr.mxu0 0.0
    %527 = vmatpush1.msra.mxu0 0.0
    %528 = vmatprep.subr.mxu0 0.0
    %529 = vmatpush1.msra.mxu0 0.0
    %530 = vmatprep.subr.mxu0 0.0
    %531 = vmatpush1.msra.mxu0 0.0
    %532 = vmatprep.subr.mxu0 0.0
    %533 = vmatpush1.msra.mxu0 0.0
    %534 = vmatprep.subr.mxu0 0.0
    %535 = vmatpush1.msra.mxu0 0.0
    %536 = vmatprep.subr.mxu0 0.0
    %537 = vmatpush1.msra.mxu0 0.0
    %538 = vmatprep.subr.mxu0 0.0
    %539 = vmatpush1.msra.mxu0 0.0
    %540 = vmatprep.subr.mxu0 0.0
    %541 = vmatpush1.msra.mxu0 0.0
    %542 = vmatprep.subr.mxu0 0.0
    %543 = vmatpush1.msra.mxu0 0.0
    %544 = vmatprep.subr.mxu0 0.0
    %545 = vmatpush1.msra.mxu0 0.0
    %546 = vmatprep.subr.mxu0 0.0
    %547 = vmatpush1.msra.mxu0 0.0
    %548 = vmatprep.subr.mxu0 0.0
    %549 = vmatpush1.msra.mxu0 0.0
    %550 = vmatprep.subr.mxu0 0.0
    %551 = vmatpush1.msra.mxu0 0.0
    %552 = vmatprep.subr.mxu0 0.0
    %553 = vmatpush1.msra.mxu0 0.0
    %554 = vmatprep.subr.mxu0 0.0
    %555 = vmatpush1.msra.mxu0 0.0
    %556 = vmatprep.subr.mxu0 0.0
    %557 = vmatpush1.msra.mxu0 0.0
    %558 = vmatprep.subr.mxu0 0.0
    %559 = vmatpush1.msra.mxu0 0.0
    %560 = vmatprep.subr.mxu0 0.0
    %561 = vmatpush1.msra.mxu0 0.0
    %562 = vmatprep.subr.mxu0 0.0
    %563 = vmatpush1.msra.mxu0 0.0
    %564 = vmatprep.subr.mxu0 0.0
    %565 = vmatpush1.msra.mxu0 0.0
    %566 = vmatprep.subr.mxu0 0.0
    %567 = vmatpush1.msra.mxu0 0.0
    %568 = vmatprep.subr.mxu0 0.0
    %569 = vmatpush1.msra.mxu0 0.0
    %570 = vmatprep.subr.mxu0 0.0
    %571 = vmatpush1.msra.mxu0 0.0
    %572 = vmatprep.subr.mxu0 0.0
    %573 = vmatpush1.msra.mxu0 0.0
    %574 = vmatprep.subr.mxu0 0.0
    %575 = vmatpush1.msra.mxu0 0.0
    %576 = vmatprep.subr.mxu0 0.0
    %577 = vmatpush1.msra.mxu0 0.0
    %578 = vmatprep.subr.mxu0 0.0
    %579 = vmatpush1.msra.mxu0 0.0
    %580 = vmatprep.subr.mxu0 0.0
    %581 = vmatpush1.msra.mxu0 0.0
    %582 = vmatprep.subr.mxu0 0.0
    %583 = vmatpush1.msra.mxu0 0.0
    %584 = vmatprep.subr.mxu0 0.0
    %585 = vmatpush1.msra.mxu0 0.0
    %586 = vmatprep.subr.mxu0 0.0
    %587 = vmatpush1.msra.mxu0 0.0
    %588 = vmatprep.mubr.f32.mxu0 0.0
    %589 = vmatmul.mubr.f32.gmra.mrb[0].mxu0 %v42
    %v590 = vpop.f32.mrb[0].mxu0
    %v591 = vadd.f32 0.0, %v590
    %v592 = vpop.f32.mrb[0].mxu0
    %593 = vmatprep.mubr.f32.mxu0 0.0
    %594 = vmatmul.mubr.f32.gmra.mrb[0].mxu0 %v45
    %v595 = vpop.f32.mrb[0].mxu0
    %v596 = vadd.f32 0.0, %v595
    %v597 = vpop.f32.mrb[0].mxu0
    %598 = vdwg.mxu0
    %v600 = vsel %vm40, %v591, 0
    %v603 = vsel %vm40, %v596, 0
    %605 = vmatprep.subr.mxu0 0.0
    %606 = vmatpush1.msra.mxu0 %v39
    %607 = vmatprep.subr.mxu0 0.0
    %608 = vmatpush1.msra.mxu0 0.0
    %609 = vmatprep.subr.mxu0 0.0
    %610 = vmatpush1.msra.mxu0 0.0
    %611 = vmatprep.subr.mxu0 0.0
    %612 = vmatpush1.msra.mxu0 0.0
    %613 = vmatprep.subr.mxu0 0.0
    %614 = vmatpush1.msra.mxu0 0.0
    %615 = vmatprep.subr.mxu0 0.0
    %616 = vmatpush1.msra.mxu0 0.0
    %617 = vmatprep.subr.mxu0 0.0
    %618 = vmatpush1.msra.mxu0 0.0
    %619 = vmatprep.subr.mxu0 0.0
    %620 = vmatpush1.msra.mxu0 0.0
    %621 = vmatprep.subr.mxu0 0.0
    %622 = vmatpush1.msra.mxu0 0.0
    %623 = vmatprep.subr.mxu0 0.0
    %624 = vmatpush1.msra.mxu0 0.0
    %625 = vmatprep.subr.mxu0 0.0
    %626 = vmatpush1.msra.mxu0 0.0
    %627 = vmatprep.subr.mxu0 0.0
    %628 = vmatpush1.msra.mxu0 0.0
    %629 = vmatprep.subr.mxu0 0.0
    %630 = vmatpush1.msra.mxu0 0.0
    %631 = vmatprep.subr.mxu0 0.0
    %632 = vmatpush1.msra.mxu0 0.0
    %633 = vmatprep.subr.mxu0 0.0
    %634 = vmatpush1.msra.mxu0 0.0
    %635 = vmatprep.subr.mxu0 0.0
    %636 = vmatpush1.msra.mxu0 0.0
    %637 = vmatprep.subr.mxu0 0.0
    %638 = vmatpush1.msra.mxu0 0.0
    %639 = vmatprep.subr.mxu0 0.0
    %640 = vmatpush1.msra.mxu0 0.0
    %641 = vmatprep.subr.mxu0 0.0
    %642 = vmatpush1.msra.mxu0 0.0
    %643 = vmatprep.subr.mxu0 0.0
    %644 = vmatpush1.msra.mxu0 0.0
    %645 = vmatprep.subr.mxu0 0.0
    %646 = vmatpush1.msra.mxu0 0.0
    %647 = vmatprep.subr.mxu0 0.0
    %648 = vmatpush1.msra.mxu0 0.0
    %649 = vmatprep.subr.mxu0 0.0
    %650 = vmatpush1.msra.mxu0 0.0
    %651 = vmatprep.subr.mxu0 0.0
    %652 = vmatpush1.msra.mxu0 0.0
    %653 = vmatprep.subr.mxu0 0.0
    %654 = vmatpush1.msra.mxu0 0.0
    %655 = vmatprep.subr.mxu0 0.0
    %656 = vmatpush1.msra.mxu0 0.0
    %657 = vmatprep.subr.mxu0 0.0
    %658 = vmatpush1.msra.mxu0 0.0
    %659 = vmatprep.subr.mxu0 0.0
    %660 = vmatpush1.msra.mxu0 0.0
    %661 = vmatprep.subr.mxu0 0.0
    %662 = vmatpush1.msra.mxu0 0.0
    %663 = vmatprep.subr.mxu0 0.0
    %664 = vmatpush1.msra.mxu0 0.0
    %665 = vmatprep.subr.mxu0 0.0
    %666 = vmatpush1.msra.mxu0 0.0
    %667 = vmatprep.subr.mxu0 0.0
    %668 = vmatpush1.msra.mxu0 0.0
    %669 = vmatprep.mubr.f32.mxu0 0.0
    %670 = vmatmul.mubr.f32.gmra.mrb[0].mxu0 %v600
    %v671 = vpop.f32.mrb[0].mxu0
    %v672 = vadd.f32 0.0, %v671
    %v673 = vpop.f32.mrb[0].mxu0
    %674 = vmatprep.mubr.f32.mxu0 0.0
    %675 = vmatmul.mubr.f32.gmra.mrb[0].mxu0 %v603
    %v676 = vpop.f32.mrb[0].mxu0
    %v677 = vadd.f32 0.0, %v676
    %v678 = vpop.f32.mrb[0].mxu0
    %679 = vdwg.mxu0
    %s680 = scalar_lea.vmem [#allocation5], 48
    %681 = vst.msk [vmem:[%s680] sm:$0xff] %vm203, %v672
    %682 = vst.msk [vmem:[%s680 + $0x8] sm:$0xff] %vm203, %v677
    %683 = vmatprep.subr.mxu0 0.0
    %684 = vmatpush1.msra.mxu0 %v33
    %685 = vmatprep.subr.mxu0 0.0
    %686 = vmatpush1.msra.mxu0 0.0
    %687 = vmatprep.subr.mxu0 0.0
    %688 = vmatpush1.msra.mxu0 0.0
    %689 = vmatprep.subr.mxu0 0.0
    %690 = vmatpush1.msra.mxu0 0.0
    %691 = vmatprep.subr.mxu0 0.0
    %692 = vmatpush1.msra.mxu0 0.0
    %693 = vmatprep.subr.mxu0 0.0
    %694 = vmatpush1.msra.mxu0 0.0
    %695 = vmatprep.subr.mxu0 0.0
    %696 = vmatpush1.msra.mxu0 0.0
    %697 = vmatprep.subr.mxu0 0.0
    %698 = vmatpush1.msra.mxu0 0.0
    %699 = vmatprep.subr.mxu0 0.0
    %700 = vmatpush1.msra.mxu0 0.0
    %701 = vmatprep.subr.mxu0 0.0
    %702 = vmatpush1.msra.mxu0 0.0
    %703 = vmatprep.subr.mxu0 0.0
    %704 = vmatpush1.msra.mxu0 0.0
    %705 = vmatprep.subr.mxu0 0.0
    %706 = vmatpush1.msra.mxu0 0.0
    %707 = vmatprep.subr.mxu0 0.0
    %708 = vmatpush1.msra.mxu0 0.0
    %709 = vmatprep.subr.mxu0 0.0
    %710 = vmatpush1.msra.mxu0 0.0
    %711 = vmatprep.subr.mxu0 0.0
    %712 = vmatpush1.msra.mxu0 0.0
    %713 = vmatprep.subr.mxu0 0.0
    %714 = vmatpush1.msra.mxu0 0.0
    %715 = vmatprep.subr.mxu0 0.0
    %716 = vmatpush1.msra.mxu0 0.0
    %717 = vmatprep.subr.mxu0 0.0
    %718 = vmatpush1.msra.mxu0 0.0
    %719 = vmatprep.subr.mxu0 0.0
    %720 = vmatpush1.msra.mxu0 0.0
    %721 = vmatprep.subr.mxu0 0.0
    %722 = vmatpush1.msra.mxu0 0.0
    %723 = vmatprep.subr.mxu0 0.0
    %724 = vmatpush1.msra.mxu0 0.0
    %725 = vmatprep.subr.mxu0 0.0
    %726 = vmatpush1.msra.mxu0 0.0
    %727 = vmatprep.subr.mxu0 0.0
    %728 = vmatpush1.msra.mxu0 0.0
    %729 = vmatprep.subr.mxu0 0.0
    %730 = vmatpush1.msra.mxu0 0.0
    %731 = vmatprep.subr.mxu0 0.0
    %732 = vmatpush1.msra.mxu0 0.0
    %733 = vmatprep.subr.mxu0 0.0
    %734 = vmatpush1.msra.mxu0 0.0
    %735 = vmatprep.subr.mxu0 0.0
    %736 = vmatpush1.msra.mxu0 0.0
    %737 = vmatprep.subr.mxu0 0.0
    %738 = vmatpush1.msra.mxu0 0.0
    %739 = vmatprep.subr.mxu0 0.0
    %740 = vmatpush1.msra.mxu0 0.0
    %741 = vmatprep.subr.mxu0 0.0
    %742 = vmatpush1.msra.mxu0 0.0
    %743 = vmatprep.subr.mxu0 0.0
    %744 = vmatpush1.msra.mxu0 0.0
    %745 = vmatprep.subr.mxu0 0.0
    %746 = vmatpush1.msra.mxu0 0.0
    %747 = vmatprep.mubr.f32.mxu0 0.0
    %748 = vmatmul.mubr.f32.gmra.mrb[0].mxu0 %v42
    %v749 = vpop.f32.mrb[0].mxu0
    %v750 = vadd.f32 0.0, %v749
    %v751 = vpop.f32.mrb[0].mxu0
    %752 = vmatprep.mubr.f32.mxu0 0.0
    %753 = vmatmul.mubr.f32.gmra.mrb[0].mxu0 %v45
    %v754 = vpop.f32.mrb[0].mxu0
    %v755 = vadd.f32 0.0, %v754
    %v756 = vpop.f32.mrb[0].mxu0
    %757 = vdwg.mxu0
    %v759 = vsel %vm40, %v750, 0
    %v762 = vsel %vm40, %v755, 0
    %764 = vmatprep.subr.mxu0 0.0
    %765 = vmatpush1.msra.mxu0 %v39
    %766 = vmatprep.subr.mxu0 0.0
    %767 = vmatpush1.msra.mxu0 0.0
    %768 = vmatprep.subr.mxu0 0.0
    %769 = vmatpush1.msra.mxu0 0.0
    %770 = vmatprep.subr.mxu0 0.0
    %771 = vmatpush1.msra.mxu0 0.0
    %772 = vmatprep.subr.mxu0 0.0
    %773 = vmatpush1.msra.mxu0 0.0
    %774 = vmatprep.subr.mxu0 0.0
    %775 = vmatpush1.msra.mxu0 0.0
    %776 = vmatprep.subr.mxu0 0.0
    %777 = vmatpush1.msra.mxu0 0.0
    %778 = vmatprep.subr.mxu0 0.0
    %779 = vmatpush1.msra.mxu0 0.0
    %780 = vmatprep.subr.mxu0 0.0
    %781 = vmatpush1.msra.mxu0 0.0
    %782 = vmatprep.subr.mxu0 0.0
    %783 = vmatpush1.msra.mxu0 0.0
    %784 = vmatprep.subr.mxu0 0.0
    %785 = vmatpush1.msra.mxu0 0.0
    %786 = vmatprep.subr.mxu0 0.0
    %787 = vmatpush1.msra.mxu0 0.0
    %788 = vmatprep.subr.mxu0 0.0
    %789 = vmatpush1.msra.mxu0 0.0
    %790 = vmatprep.subr.mxu0 0.0
    %791 = vmatpush1.msra.mxu0 0.0
    %792 = vmatprep.subr.mxu0 0.0
    %793 = vmatpush1.msra.mxu0 0.0
    %794 = vmatprep.subr.mxu0 0.0
    %795 = vmatpush1.msra.mxu0 0.0
    %796 = vmatprep.subr.mxu0 0.0
    %797 = vmatpush1.msra.mxu0 0.0
    %798 = vmatprep.subr.mxu0 0.0
    %799 = vmatpush1.msra.mxu0 0.0
    %800 = vmatprep.subr.mxu0 0.0
    %801 = vmatpush1.msra.mxu0 0.0
    %802 = vmatprep.subr.mxu0 0.0
    %803 = vmatpush1.msra.mxu0 0.0
    %804 = vmatprep.subr.mxu0 0.0
    %805 = vmatpush1.msra.mxu0 0.0
    %806 = vmatprep.subr.mxu0 0.0
    %807 = vmatpush1.msra.mxu0 0.0
    %808 = vmatprep.subr.mxu0 0.0
    %809 = vmatpush1.msra.mxu0 0.0
    %810 = vmatprep.subr.mxu0 0.0
    %811 = vmatpush1.msra.mxu0 0.0
    %812 = vmatprep.subr.mxu0 0.0
    %813 = vmatpush1.msra.mxu0 0.0
    %814 = vmatprep.subr.mxu0 0.0
    %815 = vmatpush1.msra.mxu0 0.0
    %816 = vmatprep.subr.mxu0 0.0
    %817 = vmatpush1.msra.mxu0 0.0
    %818 = vmatprep.subr.mxu0 0.0
    %819 = vmatpush1.msra.mxu0 0.0
    %820 = vmatprep.subr.mxu0 0.0
    %821 = vmatpush1.msra.mxu0 0.0
    %822 = vmatprep.subr.mxu0 0.0
    %823 = vmatpush1.msra.mxu0 0.0
    %824 = vmatprep.subr.mxu0 0.0
    %825 = vmatpush1.msra.mxu0 0.0
    %826 = vmatprep.subr.mxu0 0.0
    %827 = vmatpush1.msra.mxu0 0.0
    %828 = vmatprep.mubr.f32.mxu0 0.0
    %829 = vmatmul.mubr.f32.gmra.mrb[0].mxu0 %v759
    %v830 = vpop.f32.mrb[0].mxu0
    %v831 = vadd.f32 0.0, %v830
    %v832 = vpop.f32.mrb[0].mxu0
    %833 = vmatprep.mubr.f32.mxu0 0.0
    %834 = vmatmul.mubr.f32.gmra.mrb[0].mxu0 %v762
    %v835 = vpop.f32.mrb[0].mxu0
    %v836 = vadd.f32 0.0, %v835
    %v837 = vpop.f32.mrb[0].mxu0
    %838 = vdwg.mxu0
    %s839 = scalar_lea.vmem [#allocation5], 64
    %840 = vst.msk [vmem:[%s839] sm:$0xff] %vm203, %v831
    %841 = vst.msk [vmem:[%s839 + $0x8] sm:$0xff] %vm203, %v836
    %842 = vmatprep.subr.mxu0 0.0
    %843 = vmatpush1.msra.mxu0 %v34
    %844 = vmatprep.subr.mxu0 0.0
    %845 = vmatpush1.msra.mxu0 0.0
    %846 = vmatprep.subr.mxu0 0.0
    %847 = vmatpush1.msra.mxu0 0.0
    %848 = vmatprep.subr.mxu0 0.0
    %849 = vmatpush1.msra.mxu0 0.0
    %850 = vmatprep.subr.mxu0 0.0
    %851 = vmatpush1.msra.mxu0 0.0
    %852 = vmatprep.subr.mxu0 0.0
    %853 = vmatpush1.msra.mxu0 0.0
    %854 = vmatprep.subr.mxu0 0.0
    %855 = vmatpush1.msra.mxu0 0.0
    %856 = vmatprep.subr.mxu0 0.0
    %857 = vmatpush1.msra.mxu0 0.0
    %858 = vmatprep.subr.mxu0 0.0
    %859 = vmatpush1.msra.mxu0 0.0
    %860 = vmatprep.subr.mxu0 0.0
    %861 = vmatpush1.msra.mxu0 0.0
    %862 = vmatprep.subr.mxu0 0.0
    %863 = vmatpush1.msra.mxu0 0.0
    %864 = vmatprep.subr.mxu0 0.0
    %865 = vmatpush1.msra.mxu0 0.0
    %866 = vmatprep.subr.mxu0 0.0
    %867 = vmatpush1.msra.mxu0 0.0
    %868 = vmatprep.subr.mxu0 0.0
    %869 = vmatpush1.msra.mxu0 0.0
    %870 = vmatprep.subr.mxu0 0.0
    %871 = vmatpush1.msra.mxu0 0.0
    %872 = vmatprep.subr.mxu0 0.0
    %873 = vmatpush1.msra.mxu0 0.0
    %874 = vmatprep.subr.mxu0 0.0
    %875 = vmatpush1.msra.mxu0 0.0
    %876 = vmatprep.subr.mxu0 0.0
    %877 = vmatpush1.msra.mxu0 0.0
    %878 = vmatprep.subr.mxu0 0.0
    %879 = vmatpush1.msra.mxu0 0.0
    %880 = vmatprep.subr.mxu0 0.0
    %881 = vmatpush1.msra.mxu0 0.0
    %882 = vmatprep.subr.mxu0 0.0
    %883 = vmatpush1.msra.mxu0 0.0
    %884 = vmatprep.subr.mxu0 0.0
    %885 = vmatpush1.msra.mxu0 0.0
    %886 = vmatprep.subr.mxu0 0.0
    %887 = vmatpush1.msra.mxu0 0.0
    %888 = vmatprep.subr.mxu0 0.0
    %889 = vmatpush1.msra.mxu0 0.0
    %890 = vmatprep.subr.mxu0 0.0
    %891 = vmatpush1.msra.mxu0 0.0
    %892 = vmatprep.subr.mxu0 0.0
    %893 = vmatpush1.msra.mxu0 0.0
    %894 = vmatprep.subr.mxu0 0.0
    %895 = vmatpush1.msra.mxu0 0.0
    %896 = vmatprep.subr.mxu0 0.0
    %897 = vmatpush1.msra.mxu0 0.0
    %898 = vmatprep.subr.mxu0 0.0
    %899 = vmatpush1.msra.mxu0 0.0
    %900 = vmatprep.subr.mxu0 0.0
    %901 = vmatpush1.msra.mxu0 0.0
    %902 = vmatprep.subr.mxu0 0.0
    %903 = vmatpush1.msra.mxu0 0.0
    %904 = vmatprep.subr.mxu0 0.0
    %905 = vmatpush1.msra.mxu0 0.0
    %906 = vmatprep.mubr.f32.mxu0 0.0
    %907 = vmatmul.mubr.f32.gmra.mrb[0].mxu0 %v42
    %v908 = vpop.f32.mrb[0].mxu0
    %v909 = vadd.f32 0.0, %v908
    %v910 = vpop.f32.mrb[0].mxu0
    %911 = vmatprep.mubr.f32.mxu0 0.0
    %912 = vmatmul.mubr.f32.gmra.mrb[0].mxu0 %v45
    %v913 = vpop.f32.mrb[0].mxu0
    %v914 = vadd.f32 0.0, %v913
    %v915 = vpop.f32.mrb[0].mxu0
    %916 = vdwg.mxu0
    %v918 = vsel %vm40, %v909, 0
    %v921 = vsel %vm40, %v914, 0
    %923 = vmatprep.subr.mxu0 0.0
    %924 = vmatpush1.msra.mxu0 %v39
    %925 = vmatprep.subr.mxu0 0.0
    %926 = vmatpush1.msra.mxu0 0.0
    %927 = vmatprep.subr.mxu0 0.0
    %928 = vmatpush1.msra.mxu0 0.0
    %929 = vmatprep.subr.mxu0 0.0
    %930 = vmatpush1.msra.mxu0 0.0
    %931 = vmatprep.subr.mxu0 0.0
    %932 = vmatpush1.msra.mxu0 0.0
    %933 = vmatprep.subr.mxu0 0.0
    %934 = vmatpush1.msra.mxu0 0.0
    %935 = vmatprep.subr.mxu0 0.0
    %936 = vmatpush1.msra.mxu0 0.0
    %937 = vmatprep.subr.mxu0 0.0
    %938 = vmatpush1.msra.mxu0 0.0
    %939 = vmatprep.subr.mxu0 0.0
    %940 = vmatpush1.msra.mxu0 0.0
    %941 = vmatprep.subr.mxu0 0.0
    %942 = vmatpush1.msra.mxu0 0.0
    %943 = vmatprep.subr.mxu0 0.0
    %944 = vmatpush1.msra.mxu0 0.0
    %945 = vmatprep.subr.mxu0 0.0
    %946 = vmatpush1.msra.mxu0 0.0
    %947 = vmatprep.subr.mxu0 0.0
    %948 = vmatpush1.msra.mxu0 0.0
    %949 = vmatprep.subr.mxu0 0.0
    %950 = vmatpush1.msra.mxu0 0.0
    %951 = vmatprep.subr.mxu0 0.0
    %952 = vmatpush1.msra.mxu0 0.0
    %953 = vmatprep.subr.mxu0 0.0
    %954 = vmatpush1.msra.mxu0 0.0
    %955 = vmatprep.subr.mxu0 0.0
    %956 = vmatpush1.msra.mxu0 0.0
    %957 = vmatprep.subr.mxu0 0.0
    %958 = vmatpush1.msra.mxu0 0.0
    %959 = vmatprep.subr.mxu0 0.0
    %960 = vmatpush1.msra.mxu0 0.0
    %961 = vmatprep.subr.mxu0 0.0
    %962 = vmatpush1.msra.mxu0 0.0
    %963 = vmatprep.subr.mxu0 0.0
    %964 = vmatpush1.msra.mxu0 0.0
    %965 = vmatprep.subr.mxu0 0.0
    %966 = vmatpush1.msra.mxu0 0.0
    %967 = vmatprep.subr.mxu0 0.0
    %968 = vmatpush1.msra.mxu0 0.0
    %969 = vmatprep.subr.mxu0 0.0
    %970 = vmatpush1.msra.mxu0 0.0
    %971 = vmatprep.subr.mxu0 0.0
    %972 = vmatpush1.msra.mxu0 0.0
    %973 = vmatprep.subr.mxu0 0.0
    %974 = vmatpush1.msra.mxu0 0.0
    %975 = vmatprep.subr.mxu0 0.0
    %976 = vmatpush1.msra.mxu0 0.0
    %977 = vmatprep.subr.mxu0 0.0
    %978 = vmatpush1.msra.mxu0 0.0
    %979 = vmatprep.subr.mxu0 0.0
    %980 = vmatpush1.msra.mxu0 0.0
    %981 = vmatprep.subr.mxu0 0.0
    %982 = vmatpush1.msra.mxu0 0.0
    %983 = vmatprep.subr.mxu0 0.0
    %984 = vmatpush1.msra.mxu0 0.0
    %985 = vmatprep.subr.mxu0 0.0
    %986 = vmatpush1.msra.mxu0 0.0
    %987 = vmatprep.mubr.f32.mxu0 0.0
    %988 = vmatmul.mubr.f32.gmra.mrb[0].mxu0 %v918
    %v989 = vpop.f32.mrb[0].mxu0
    %v990 = vadd.f32 0.0, %v989
    %v991 = vpop.f32.mrb[0].mxu0
    %992 = vmatprep.mubr.f32.mxu0 0.0
    %993 = vmatmul.mubr.f32.gmra.mrb[0].mxu0 %v921
    %v994 = vpop.f32.mrb[0].mxu0
    %v995 = vadd.f32 0.0, %v994
    %v996 = vpop.f32.mrb[0].mxu0
    %997 = vdwg.mxu0
    %s998 = scalar_lea.vmem [#allocation5], 80
    %999 = vst.msk [vmem:[%s998] sm:$0xff] %vm203, %v990
    %1000 = vst.msk [vmem:[%s998 + $0x8] sm:$0xff] %vm203, %v995
    %1001 = vmatprep.subr.mxu0 0.0
    %1002 = vmatpush1.msra.mxu0 %v35
    %1003 = vmatprep.subr.mxu0 0.0
    %1004 = vmatpush1.msra.mxu0 0.0
    %1005 = vmatprep.subr.mxu0 0.0
    %1006 = vmatpush1.msra.mxu0 0.0
    %1007 = vmatprep.subr.mxu0 0.0
    %1008 = vmatpush1.msra.mxu0 0.0
    %1009 = vmatprep.subr.mxu0 0.0
    %1010 = vmatpush1.msra.mxu0 0.0
    %1011 = vmatprep.subr.mxu0 0.0
    %1012 = vmatpush1.msra.mxu0 0.0
    %1013 = vmatprep.subr.mxu0 0.0
    %1014 = vmatpush1.msra.mxu0 0.0
    %1015 = vmatprep.subr.mxu0 0.0
    %1016 = vmatpush1.msra.mxu0 0.0
    %1017 = vmatprep.subr.mxu0 0.0
    %1018 = vmatpush1.msra.mxu0 0.0
    %1019 = vmatprep.subr.mxu0 0.0
    %1020 = vmatpush1.msra.mxu0 0.0
    %1021 = vmatprep.subr.mxu0 0.0
    %1022 = vmatpush1.msra.mxu0 0.0
    %1023 = vmatprep.subr.mxu0 0.0
    %1024 = vmatpush1.msra.mxu0 0.0
    %1025 = vmatprep.subr.mxu0 0.0
    %1026 = vmatpush1.msra.mxu0 0.0
    %1027 = vmatprep.subr.mxu0 0.0
    %1028 = vmatpush1.msra.mxu0 0.0
    %1029 = vmatprep.subr.mxu0 0.0
    %1030 = vmatpush1.msra.mxu0 0.0
    %1031 = vmatprep.subr.mxu0 0.0
    %1032 = vmatpush1.msra.mxu0 0.0
    %1033 = vmatprep.subr.mxu0 0.0
    %1034 = vmatpush1.msra.mxu0 0.0
    %1035 = vmatprep.subr.mxu0 0.0
    %1036 = vmatpush1.msra.mxu0 0.0
    %1037 = vmatprep.subr.mxu0 0.0
    %1038 = vmatpush1.msra.mxu0 0.0
    %1039 = vmatprep.subr.mxu0 0.0
    %1040 = vmatpush1.msra.mxu0 0.0
    %1041 = vmatprep.subr.mxu0 0.0
    %1042 = vmatpush1.msra.mxu0 0.0
    %1043 = vmatprep.subr.mxu0 0.0
    %1044 = vmatpush1.msra.mxu0 0.0
    %1045 = vmatprep.subr.mxu0 0.0
    %1046 = vmatpush1.msra.mxu0 0.0
    %1047 = vmatprep.subr.mxu0 0.0
    %1048 = vmatpush1.msra.mxu0 0.0
    %1049 = vmatprep.subr.mxu0 0.0
    %1050 = vmatpush1.msra.mxu0 0.0
    %1051 = vmatprep.subr.mxu0 0.0
    %1052 = vmatpush1.msra.mxu0 0.0
    %1053 = vmatprep.subr.mxu0 0.0
    %1054 = vmatpush1.msra.mxu0 0.0
    %1055 = vmatprep.subr.mxu0 0.0
    %1056 = vmatpush1.msra.mxu0 0.0
    %1057 = vmatprep.subr.mxu0 0.0
    %1058 = vmatpush1.msra.mxu0 0.0
    %1059 = vmatprep.subr.mxu0 0.0
    %1060 = vmatpush1.msra.mxu0 0.0
    %1061 = vmatprep.subr.mxu0 0.0
    %1062 = vmatpush1.msra.mxu0 0.0
    %1063 = vmatprep.subr.mxu0 0.0
    %1064 = vmatpush1.msra.mxu0 0.0
    %1065 = vmatprep.mubr.f32.mxu0 0.0
    %1066 = vmatmul.mubr.f32.gmra.mrb[0].mxu0 %v42
    %v1067 = vpop.f32.mrb[0].mxu0
    %v1068 = vadd.f32 0.0, %v1067
    %v1069 = vpop.f32.mrb[0].mxu0
    %1070 = vmatprep.mubr.f32.mxu0 0.0
    %1071 = vmatmul.mubr.f32.gmra.mrb[0].mxu0 %v45
    %v1072 = vpop.f32.mrb[0].mxu0
    %v1073 = vadd.f32 0.0, %v1072
    %v1074 = vpop.f32.mrb[0].mxu0
    %1075 = vdwg.mxu0
    %v1077 = vsel %vm40, %v1068, 0
    %v1080 = vsel %vm40, %v1073, 0
    %1082 = vmatprep.subr.mxu0 0.0
    %1083 = vmatpush1.msra.mxu0 %v39
    %1084 = vmatprep.subr.mxu0 0.0
    %1085 = vmatpush1.msra.mxu0 0.0
    %1086 = vmatprep.subr.mxu0 0.0
    %1087 = vmatpush1.msra.mxu0 0.0
    %1088 = vmatprep.subr.mxu0 0.0
    %1089 = vmatpush1.msra.mxu0 0.0
    %1090 = vmatprep.subr.mxu0 0.0
    %1091 = vmatpush1.msra.mxu0 0.0
    %1092 = vmatprep.subr.mxu0 0.0
    %1093 = vmatpush1.msra.mxu0 0.0
    %1094 = vmatprep.subr.mxu0 0.0
    %1095 = vmatpush1.msra.mxu0 0.0
    %1096 = vmatprep.subr.mxu0 0.0
    %1097 = vmatpush1.msra.mxu0 0.0
    %1098 = vmatprep.subr.mxu0 0.0
    %1099 = vmatpush1.msra.mxu0 0.0
    %1100 = vmatprep.subr.mxu0 0.0
    %1101 = vmatpush1.msra.mxu0 0.0
    %1102 = vmatprep.subr.mxu0 0.0
    %1103 = vmatpush1.msra.mxu0 0.0
    %1104 = vmatprep.subr.mxu0 0.0
    %1105 = vmatpush1.msra.mxu0 0.0
    %1106 = vmatprep.subr.mxu0 0.0
    %1107 = vmatpush1.msra.mxu0 0.0
    %1108 = vmatprep.subr.mxu0 0.0
    %1109 = vmatpush1.msra.mxu0 0.0
    %1110 = vmatprep.subr.mxu0 0.0
    %1111 = vmatpush1.msra.mxu0 0.0
    %1112 = vmatprep.subr.mxu0 0.0
    %1113 = vmatpush1.msra.mxu0 0.0
    %1114 = vmatprep.subr.mxu0 0.0
    %1115 = vmatpush1.msra.mxu0 0.0
    %1116 = vmatprep.subr.mxu0 0.0
    %1117 = vmatpush1.msra.mxu0 0.0
    %1118 = vmatprep.subr.mxu0 0.0
    %1119 = vmatpush1.msra.mxu0 0.0
    %1120 = vmatprep.subr.mxu0 0.0
    %1121 = vmatpush1.msra.mxu0 0.0
    %1122 = vmatprep.subr.mxu0 0.0
    %1123 = vmatpush1.msra.mxu0 0.0
    %1124 = vmatprep.subr.mxu0 0.0
    %1125 = vmatpush1.msra.mxu0 0.0
    %1126 = vmatprep.subr.mxu0 0.0
    %1127 = vmatpush1.msra.mxu0 0.0
    %1128 = vmatprep.subr.mxu0 0.0
    %1129 = vmatpush1.msra.mxu0 0.0
    %1130 = vmatprep.subr.mxu0 0.0
    %1131 = vmatpush1.msra.mxu0 0.0
    %1132 = vmatprep.subr.mxu0 0.0
    %1133 = vmatpush1.msra.mxu0 0.0
    %1134 = vmatprep.subr.mxu0 0.0
    %1135 = vmatpush1.msra.mxu0 0.0
    %1136 = vmatprep.subr.mxu0 0.0
    %1137 = vmatpush1.msra.mxu0 0.0
    %1138 = vmatprep.subr.mxu0 0.0
    %1139 = vmatpush1.msra.mxu0 0.0
    %1140 = vmatprep.subr.mxu0 0.0
    %1141 = vmatpush1.msra.mxu0 0.0
    %1142 = vmatprep.subr.mxu0 0.0
    %1143 = vmatpush1.msra.mxu0 0.0
    %1144 = vmatprep.subr.mxu0 0.0
    %1145 = vmatpush1.msra.mxu0 0.0
    %1146 = vmatprep.mubr.f32.mxu0 0.0
    %1147 = vmatmul.mubr.f32.gmra.mrb[0].mxu0 %v1077
    %v1148 = vpop.f32.mrb[0].mxu0
    %v1149 = vadd.f32 0.0, %v1148
    %v1150 = vpop.f32.mrb[0].mxu0
    %1151 = vmatprep.mubr.f32.mxu0 0.0
    %1152 = vmatmul.mubr.f32.gmra.mrb[0].mxu0 %v1080
    %v1153 = vpop.f32.mrb[0].mxu0
    %v1154 = vadd.f32 0.0, %v1153
    %v1155 = vpop.f32.mrb[0].mxu0
    %1156 = vdwg.mxu0
    %s1157 = scalar_lea.vmem [#allocation5], 96
    %1158 = vst.msk [vmem:[%s1157] sm:$0xff] %vm203, %v1149
    %1159 = vst.msk [vmem:[%s1157 + $0x8] sm:$0xff] %vm203, %v1154
    %1160 = vmatprep.subr.mxu0 0.0
    %1161 = vmatpush1.msra.mxu0 %v36
    %1162 = vmatprep.subr.mxu0 0.0
    %1163 = vmatpush1.msra.mxu0 0.0
    %1164 = vmatprep.subr.mxu0 0.0
    %1165 = vmatpush1.msra.mxu0 0.0
    %1166 = vmatprep.subr.mxu0 0.0
    %1167 = vmatpush1.msra.mxu0 0.0
    %1168 = vmatprep.subr.mxu0 0.0
    %1169 = vmatpush1.msra.mxu0 0.0
    %1170 = vmatprep.subr.mxu0 0.0
    %1171 = vmatpush1.msra.mxu0 0.0
    %1172 = vmatprep.subr.mxu0 0.0
    %1173 = vmatpush1.msra.mxu0 0.0
    %1174 = vmatprep.subr.mxu0 0.0
    %1175 = vmatpush1.msra.mxu0 0.0
    %1176 = vmatprep.subr.mxu0 0.0
    %1177 = vmatpush1.msra.mxu0 0.0
    %1178 = vmatprep.subr.mxu0 0.0
    %1179 = vmatpush1.msra.mxu0 0.0
    %1180 = vmatprep.subr.mxu0 0.0
    %1181 = vmatpush1.msra.mxu0 0.0
    %1182 = vmatprep.subr.mxu0 0.0
    %1183 = vmatpush1.msra.mxu0 0.0
    %1184 = vmatprep.subr.mxu0 0.0
    %1185 = vmatpush1.msra.mxu0 0.0
    %1186 = vmatprep.subr.mxu0 0.0
    %1187 = vmatpush1.msra.mxu0 0.0
    %1188 = vmatprep.subr.mxu0 0.0
    %1189 = vmatpush1.msra.mxu0 0.0
    %1190 = vmatprep.subr.mxu0 0.0
    %1191 = vmatpush1.msra.mxu0 0.0
    %1192 = vmatprep.subr.mxu0 0.0
    %1193 = vmatpush1.msra.mxu0 0.0
    %1194 = vmatprep.subr.mxu0 0.0
    %1195 = vmatpush1.msra.mxu0 0.0
    %1196 = vmatprep.subr.mxu0 0.0
    %1197 = vmatpush1.msra.mxu0 0.0
    %1198 = vmatprep.subr.mxu0 0.0
    %1199 = vmatpush1.msra.mxu0 0.0
    %1200 = vmatprep.subr.mxu0 0.0
    %1201 = vmatpush1.msra.mxu0 0.0
    %1202 = vmatprep.subr.mxu0 0.0
    %1203 = vmatpush1.msra.mxu0 0.0
    %1204 = vmatprep.subr.mxu0 0.0
    %1205 = vmatpush1.msra.mxu0 0.0
    %1206 = vmatprep.subr.mxu0 0.0
    %1207 = vmatpush1.msra.mxu0 0.0
    %1208 = vmatprep.subr.mxu0 0.0
    %1209 = vmatpush1.msra.mxu0 0.0
    %1210 = vmatprep.subr.mxu0 0.0
    %1211 = vmatpush1.msra.mxu0 0.0
    %1212 = vmatprep.subr.mxu0 0.0
    %1213 = vmatpush1.msra.mxu0 0.0
    %1214 = vmatprep.subr.mxu0 0.0
    %1215 = vmatpush1.msra.mxu0 0.0
    %1216 = vmatprep.subr.mxu0 0.0
    %1217 = vmatpush1.msra.mxu0 0.0
    %1218 = vmatprep.subr.mxu0 0.0
    %1219 = vmatpush1.msra.mxu0 0.0
    %1220 = vmatprep.subr.mxu0 0.0
    %1221 = vmatpush1.msra.mxu0 0.0
    %1222 = vmatprep.subr.mxu0 0.0
    %1223 = vmatpush1.msra.mxu0 0.0
    %1224 = vmatprep.mubr.f32.mxu0 0.0
    %1225 = vmatmul.mubr.f32.gmra.mrb[0].mxu0 %v42
    %v1226 = vpop.f32.mrb[0].mxu0
    %v1227 = vadd.f32 0.0, %v1226
    %v1228 = vpop.f32.mrb[0].mxu0
    %1229 = vmatprep.mubr.f32.mxu0 0.0
    %1230 = vmatmul.mubr.f32.gmra.mrb[0].mxu0 %v45
    %v1231 = vpop.f32.mrb[0].mxu0
    %v1232 = vadd.f32 0.0, %v1231
    %v1233 = vpop.f32.mrb[0].mxu0
    %1234 = vdwg.mxu0
    %v1236 = vsel %vm40, %v1227, 0
    %v1239 = vsel %vm40, %v1232, 0
    %1241 = vmatprep.subr.mxu0 0.0
    %1242 = vmatpush1.msra.mxu0 %v39
    %1243 = vmatprep.subr.mxu0 0.0
    %1244 = vmatpush1.msra.mxu0 0.0
    %1245 = vmatprep.subr.mxu0 0.0
    %1246 = vmatpush1.msra.mxu0 0.0
    %1247 = vmatprep.subr.mxu0 0.0
    %1248 = vmatpush1.msra.mxu0 0.0
    %1249 = vmatprep.subr.mxu0 0.0
    %1250 = vmatpush1.msra.mxu0 0.0
    %1251 = vmatprep.subr.mxu0 0.0
    %1252 = vmatpush1.msra.mxu0 0.0
    %1253 = vmatprep.subr.mxu0 0.0
    %1254 = vmatpush1.msra.mxu0 0.0
    %1255 = vmatprep.subr.mxu0 0.0
    %1256 = vmatpush1.msra.mxu0 0.0
    %1257 = vmatprep.subr.mxu0 0.0
    %1258 = vmatpush1.msra.mxu0 0.0
    %1259 = vmatprep.subr.mxu0 0.0
    %1260 = vmatpush1.msra.mxu0 0.0
    %1261 = vmatprep.subr.mxu0 0.0
    %1262 = vmatpush1.msra.mxu0 0.0
    %1263 = vmatprep.subr.mxu0 0.0
    %1264 = vmatpush1.msra.mxu0 0.0
    %1265 = vmatprep.subr.mxu0 0.0
    %1266 = vmatpush1.msra.mxu0 0.0
    %1267 = vmatprep.subr.mxu0 0.0
    %1268 = vmatpush1.msra.mxu0 0.0
    %1269 = vmatprep.subr.mxu0 0.0
    %1270 = vmatpush1.msra.mxu0 0.0
    %1271 = vmatprep.subr.mxu0 0.0
    %1272 = vmatpush1.msra.mxu0 0.0
    %1273 = vmatprep.subr.mxu0 0.0
    %1274 = vmatpush1.msra.mxu0 0.0
    %1275 = vmatprep.subr.mxu0 0.0
    %1276 = vmatpush1.msra.mxu0 0.0
    %1277 = vmatprep.subr.mxu0 0.0
    %1278 = vmatpush1.msra.mxu0 0.0
    %1279 = vmatprep.subr.mxu0 0.0
    %1280 = vmatpush1.msra.mxu0 0.0
    %1281 = vmatprep.subr.mxu0 0.0
    %1282 = vmatpush1.msra.mxu0 0.0
    %1283 = vmatprep.subr.mxu0 0.0
    %1284 = vmatpush1.msra.mxu0 0.0
    %1285 = vmatprep.subr.mxu0 0.0
    %1286 = vmatpush1.msra.mxu0 0.0
    %1287 = vmatprep.subr.mxu0 0.0
    %1288 = vmatpush1.msra.mxu0 0.0
    %1289 = vmatprep.subr.mxu0 0.0
    %1290 = vmatpush1.msra.mxu0 0.0
    %1291 = vmatprep.subr.mxu0 0.0
    %1292 = vmatpush1.msra.mxu0 0.0
    %1293 = vmatprep.subr.mxu0 0.0
    %1294 = vmatpush1.msra.mxu0 0.0
    %1295 = vmatprep.subr.mxu0 0.0
    %1296 = vmatpush1.msra.mxu0 0.0
    %1297 = vmatprep.subr.mxu0 0.0
    %1298 = vmatpush1.msra.mxu0 0.0
    %1299 = vmatprep.subr.mxu0 0.0
    %1300 = vmatpush1.msra.mxu0 0.0
    %1301 = vmatprep.subr.mxu0 0.0
    %1302 = vmatpush1.msra.mxu0 0.0
    %1303 = vmatprep.subr.mxu0 0.0
    %1304 = vmatpush1.msra.mxu0 0.0
    %1305 = vmatprep.mubr.f32.mxu0 0.0
    %1306 = vmatmul.mubr.f32.gmra.mrb[0].mxu0 %v1236
    %v1307 = vpop.f32.mrb[0].mxu0
    %v1308 = vadd.f32 0.0, %v1307
    %v1309 = vpop.f32.mrb[0].mxu0
    %1310 = vmatprep.mubr.f32.mxu0 0.0
    %1311 = vmatmul.mubr.f32.gmra.mrb[0].mxu0 %v1239
    %v1312 = vpop.f32.mrb[0].mxu0
    %v1313 = vadd.f32 0.0, %v1312
    %v1314 = vpop.f32.mrb[0].mxu0
    %1315 = vdwg.mxu0
    %s1316 = scalar_lea.vmem [#allocation5], 112
    %1317 = vst.msk [vmem:[%s1316] sm:$0xff] %vm203, %v1308
    %1318 = vst.msk [vmem:[%s1316 + $0x8] sm:$0xff] %vm203, %v1313
    // Predicated region
    $region18: #{tpu_custom_call.1} parent=1 // pred_check
      _
    $region19: #{tpu_custom_call.1} parent=1 // pred_check_branch
      %1320 = sbr.rel (0) target = $region21
    $region20: #{tpu_custom_call.1} parent=1 // pred_region
      %s1322 = ssub.s32 2048, 2048
      %1323 = vsyncadd [#allocation4], %s1322
      %s1324 = sshll.u32 [#allocation5], 4
      %s1325 = int_to_ptr.vmem [resolvable:$true] %s1324
      %1330 = dma.vmem_to_hbm [thread:$0]  %s1325, 2048, %s3, [#allocation4], 128, 128, 8
    $region21: #{tpu_custom_call.1} parent=1 // pred_fallthru
      _
    // Predicated region
    $region22: #{tpu_custom_call.1} parent=1 // pred_check
      _
    $region23: #{tpu_custom_call.1} parent=1 // pred_check_branch
      %1332 = sbr.rel (0) target = $region25
    $region24: #{tpu_custom_call.1} parent=1 // pred_region
      %1333 = dma.done [#allocation4], 2048
    $region25: #{tpu_custom_call.1} parent=1 // pred_fallthru
      _
    %1334 = vsyncpa [#allocation3], 1
    %1335 = vsyncpa [#allocation4], 1

</llo_original>
